<compile_context>
chip_gen: v6e
topology: v6e:2x2x1
jax: 0.10.0
libtpu: 0.0.40
codegen_flags: <defaults>
</compile_context>

<pallas_src>
import functools

import jax
import jax.numpy as jnp
from jax.experimental import pallas as pl
from jax.experimental.pallas import tpu as pltpu

N_FEATURES = 28 * 28   # 784
N_HIDDEN_1 = 128
N_HIDDEN_2 = 64
LATENT_PAD = 128       # latent width padded to a full 128-lane tile in-kernel

_DEF_BLOCK_B = 2048    # max batch tile; sized for v7x's 64 MiB VMEM w/ bf16 rec


def _round_up(n, m):
    return ((n + m - 1) // m) * m


def _sigmoid(x):
    # 1/(1+exp(-x)) == 0.5*tanh(0.5*x) + 0.5  (single EUP op per element).
    return 0.5 * jnp.tanh(0.5 * x) + 0.5


def autoencoder_kernel(x_ref,
                       w1_ref, b1_ref,
                       w2_ref, b2_ref,
                       w3_ref, b3_ref,
                       w4_ref, b4_ref,
                       rec_ref, latent_ref):
    """Fused 784->128->64->128->784 MLP, sigmoid after every layer.

    Weights/biases arrive pre-scaled by 0.5 so that
        sigmoid(a @ W + b) == 0.5 * tanh(a @ (0.5 W) + (0.5 b)) + 0.5
    i.e. each activation costs one tanh (EUP) + one fma (VPU).
    """
    cdt = w1_ref.dtype  # bf16 matmul-input (MXU) dtype

    # In-kernel f32 -> bf16 cast: hidden under the x DMA (kernel is HBM-bound).
    x = x_ref[...].astype(cdt)                          # (TB, 784) bf16

    def act(z):                                         # z already carries the 0.5
        return 0.5 * jnp.tanh(z) + 0.5

    # Encoder: fc1 -> sigmoid -> fc2 -> sigmoid
    h1 = act(jnp.dot(x, w1_ref[...],
                     preferred_element_type=jnp.float32) + b1_ref[...])   # (TB,128)
    lat = act(jnp.dot(h1.astype(cdt), w2_ref[...],
                      preferred_element_type=jnp.float32) + b2_ref[...])  # (TB,128)
    # lat cols >= 64 are sigmoid(0)=0.5; the matching rows of w3 are zero, so
    # they contribute nothing to fc3 and only the first 64 cols are stored.

    # Decoder: fc3 -> sigmoid -> fc4 -> sigmoid
    h3 = act(jnp.dot(lat.astype(cdt), w3_ref[...],
                     preferred_element_type=jnp.float32) + b3_ref[...])   # (TB,128)
    rec = act(jnp.dot(h3.astype(cdt), w4_ref[...],
                      preferred_element_type=jnp.float32) + b4_ref[...])  # (TB,784)

    latent_ref[...] = lat[:, :N_HIDDEN_2].astype(latent_ref.dtype)
    rec_ref[...] = rec.astype(rec_ref.dtype)


def _prepare_params(params, compute_dtype=jnp.bfloat16):
    """Fold the inner 0.5 of the tanh-sigmoid into W/b (exact: power-of-2 scale),
    cast weights to bf16, and pad the latent (64) dim up to 128 lanes.

    Padding is exact: extra w2/b2 columns are zero -> padded latent cols are
    sigmoid(0)=0.5, and the matching extra w3 rows are zero, so they contribute
    nothing to fc3.  The kernel stores only the first 64 latent columns.
    """
    w1, b1 = params["fc1"]
    w2, b2 = params["fc2"]
    w3, b3 = params["fc3"]
    w4, b4 = params["fc4"]

    pad = LATENT_PAD - N_HIDDEN_2
    w2p = jnp.pad(w2, ((0, 0), (0, pad)))
    b2p = jnp.pad(b2, ((0, 0), (0, pad)))
    w3p = jnp.pad(w3, ((0, pad), (0, 0)))

    prep_w = lambda w: (0.5 * w.astype(jnp.float32)).astype(compute_dtype)
    prep_b = lambda b: (0.5 * b.astype(jnp.float32))

    return (prep_w(w1), prep_b(b1),
            prep_w(w2p), prep_b(b2p),
            prep_w(w3p), prep_b(b3),
            prep_w(w4), prep_b(b4))


@functools.partial(jax.jit, static_argnames=("block_b",))
def autoencoder_forward(x, params, block_b=None):
    """x: [B, 784] float32. params: dict of (w, b) per layer, w stored [in, out].

    Returns {"rec": [B, 784] bf16, "latent": [B, 64] f32}.
    """
    B = x.shape[0]
    if block_b is None:
        # Multiple of 16 (bf16 sublane tile); >=2 tiles whenever the batch
        # allows it (v7x has 2 TensorCores splitting the 'parallel' grid);
        # capped so double-buffered tiles fit v7x's 64 MiB VMEM.
        block_b = min(_DEF_BLOCK_B, _round_up(max(pl.cdiv(B, 2), 1), 16))
    tb = block_b
    grid_b = pl.cdiv(B, tb)   # ragged last block handled by Pallas clipping

    w1, b1, w2, b2, w3, b3, w4, b4 = _prepare_params(params)

    full = lambda i: (0, 0)        # weights/biases: resident, fetched once
    tile = lambda i: (i, 0)        # batch-tiled arrays

    rec, latent = pl.pallas_call(
        autoencoder_kernel,
        out_shape=(
            jax.ShapeDtypeStruct((B, N_FEATURES), jnp.bfloat16),   # rec (bf16)
            jax.ShapeDtypeStruct((B, N_HIDDEN_2), jnp.float32),    # latent (64)
        ),
        grid=(grid_b,),
        in_specs=[
            pl.BlockSpec((tb, N_FEATURES), tile),          # x (f32, cast in-kernel)
            pl.BlockSpec((N_FEATURES, N_HIDDEN_1), full),  # w1 (0.5-scaled, bf16)
            pl.BlockSpec((1, N_HIDDEN_1), full),           # b1 (0.5-scaled, f32)
            pl.BlockSpec((N_HIDDEN_1, LATENT_PAD), full),  # w2 (padded cols)
            pl.BlockSpec((1, LATENT_PAD), full),           # b2 (padded cols)
            pl.BlockSpec((LATENT_PAD, N_HIDDEN_1), full),  # w3 (padded rows)
            pl.BlockSpec((1, N_HIDDEN_1), full),           # b3
            pl.BlockSpec((N_HIDDEN_1, N_FEATURES), full),  # w4
            pl.BlockSpec((1, N_FEATURES), full),           # b4
        ],
        out_specs=(
            pl.BlockSpec((tb, N_FEATURES), tile),          # rec
            pl.BlockSpec((tb, N_HIDDEN_2), tile),          # latent (64-wide)
        ),
        compiler_params=pltpu.CompilerParams(
            dimension_semantics=("parallel",),             # megacore split on v7x
            vmem_limit_bytes=56 * 1024 * 1024,             # within v7x's 64 MiB
        ),
    )(x, w1, b1, w2, b2, w3, b3, w4, b4)

    return {"rec": rec, "latent": latent}


def init_params(key):
    """Deterministic init mimicking nn.Linear's U(-1/sqrt(fan_in), 1/sqrt(fan_in))."""
    def linear(key, fan_in, fan_out):
        kw, kb = jax.random.split(key)
        bound = 1.0 / jnp.sqrt(jnp.float32(fan_in))
        # Stored as [in, out] (transposed relative to PyTorch's [out, in]).
        w = jax.random.uniform(kw, (fan_in, fan_out), jnp.float32, -bound, bound)
        b = jax.random.uniform(kb, (1, fan_out), jnp.float32, -bound, bound)
        return w, b

    k1, k2, k3, k4 = jax.random.split(key, 4)
    return {
        "fc1": linear(k1, N_FEATURES, N_HIDDEN_1),
        "fc2": linear(k2, N_HIDDEN_1, N_HIDDEN_2),
        "fc3": linear(k3, N_HIDDEN_2, N_HIDDEN_1),
        "fc4": linear(k4, N_HIDDEN_1, N_FEATURES),
    }


def reference_forward_f32(x, params):
    """Pure-JAX f32 reference of the original PyTorch forward pass."""
    w1, b1 = params["fc1"]
    w2, b2 = params["fc2"]
    w3, b3 = params["fc3"]
    w4, b4 = params["fc4"]
    h1 = jax.nn.sigmoid(x @ w1 + b1)
    latent = jax.nn.sigmoid(h1 @ w2 + b2)
    h3 = jax.nn.sigmoid(latent @ w3 + b3)
    rec = jax.nn.sigmoid(h3 @ w4 + b4)
    return {"rec": rec, "latent": latent}


def reference_forward_matched(x, params):
    """Pure-JAX reference using the same bf16-input / f32-accumulate numerics."""
    w1, b1 = params["fc1"]
    w2, b2 = params["fc2"]
    w3, b3 = params["fc3"]
    w4, b4 = params["fc4"]
    bf = jnp.bfloat16

    def layer(a, w, b):
        z = jnp.dot(a.astype(bf), w.astype(bf), preferred_element_type=jnp.float32)
        return _sigmoid(z + b.astype(jnp.float32))

    h1 = layer(x, w1, b1)
    latent = layer(h1, w2, b2)
    h3 = layer(latent, w3, b3)
    rec = layer(h3, w4, b4)
    return {"rec": rec, "latent": latent}


if __name__ == "__main__":
    key = jax.random.PRNGKey(0)
    k_params, k_x = jax.random.split(key)

    params = init_params(k_params)

    # --- small single-tile run (B=16 -> one exact 16-row tile) ---
    B = 16
    x = jax.random.uniform(k_x, (B, N_FEATURES), jnp.float32)  # pixel-like input

    out = jax.block_until_ready(autoencoder_forward(x, params))
    assert out["rec"].shape == (B, N_FEATURES)
    assert out["latent"].shape == (B, N_HIDDEN_2)
    assert out["rec"].dtype == jnp.bfloat16
    assert out["latent"].dtype == jnp.float32

    rec_f32 = out["rec"].astype(jnp.float32)
    ref_m = reference_forward_matched(x, params)
    ref_f = reference_forward_f32(x, params)
    # rec is stored in bf16 -> allow bf16 rounding on top of matched numerics.
    assert jnp.allclose(rec_f32, ref_m["rec"], atol=8e-3)
    assert jnp.allclose(out["latent"], ref_m["latent"], atol=1e-3, rtol=1e-3)
    assert jnp.allclose(rec_f32, ref_f["rec"], atol=4e-2)
    assert jnp.allclose(out["latent"], ref_f["latent"], atol=3e-2)

    # --- exercise the batch grid + ragged last tile (B=40, tb=16 -> 3 tiles) ---
    B2 = 40
    x2 = jax.random.uniform(jax.random.PRNGKey(1), (B2, N_FEATURES), jnp.float32)
    out2 = jax.block_until_ready(autoencoder_forward(x2, params, block_b=16))
    ref2 = reference_forward_matched(x2, params)
    assert out2["rec"].shape == (B2, N_FEATURES)
    assert out2["latent"].shape == (B2, N_HIDDEN_2)
    assert jnp.allclose(out2["rec"].astype(jnp.float32), ref2["rec"], atol=8e-3)
    assert jnp.allclose(out2["latent"], ref2["latent"], atol=1e-3, rtol=1e-3)

    print("KERNEL_OK")
</pallas_src>

<mosaic_0001>
module attributes {stable_mosaic.version = 11 : i64} {
  func.func @autoencoder_kernel(%arg0: i32, %arg1: memref<16x784xf32, #tpu.memory_space<vmem>>, %arg2: memref<784x128xbf16, #tpu.memory_space<vmem>>, %arg3: memref<1x128xf32, #tpu.memory_space<vmem>>, %arg4: memref<128x128xbf16, #tpu.memory_space<vmem>>, %arg5: memref<1x128xf32, #tpu.memory_space<vmem>>, %arg6: memref<128x128xbf16, #tpu.memory_space<vmem>>, %arg7: memref<1x128xf32, #tpu.memory_space<vmem>>, %arg8: memref<128x784xbf16, #tpu.memory_space<vmem>>, %arg9: memref<1x784xf32, #tpu.memory_space<vmem>>, %arg10: memref<16x784xbf16, #tpu.memory_space<vmem>>, %arg11: memref<16x64xf32, #tpu.memory_space<vmem>>) attributes {dimension_semantics = [#tpu.dimension_semantics<parallel>], iteration_bounds = array<i64: 1>, scalar_prefetch = 0 : i64, scratch_operands = 0 : i64, tpu.core_type = #tpu.core_type<tc>, window_params = [{transform_indices = @transform_0, window_bounds = array<i64: 16, 784>}, {pipeline_mode = #tpu.pipeline_mode<synchronous>, transform_indices = @transform_1, window_bounds = array<i64: 784, 128>}, {pipeline_mode = #tpu.pipeline_mode<synchronous>, transform_indices = @transform_2, window_bounds = array<i64: 1, 128>}, {pipeline_mode = #tpu.pipeline_mode<synchronous>, transform_indices = @transform_3, window_bounds = array<i64: 128, 128>}, {pipeline_mode = #tpu.pipeline_mode<synchronous>, transform_indices = @transform_4, window_bounds = array<i64: 1, 128>}, {pipeline_mode = #tpu.pipeline_mode<synchronous>, transform_indices = @transform_5, window_bounds = array<i64: 128, 128>}, {pipeline_mode = #tpu.pipeline_mode<synchronous>, transform_indices = @transform_6, window_bounds = array<i64: 1, 128>}, {pipeline_mode = #tpu.pipeline_mode<synchronous>, transform_indices = @transform_7, window_bounds = array<i64: 128, 784>}, {pipeline_mode = #tpu.pipeline_mode<synchronous>, transform_indices = @transform_8, window_bounds = array<i64: 1, 784>}, {transform_indices = @transform_9, window_bounds = array<i64: 16, 784>}, {transform_indices = @transform_10, window_bounds = array<i64: 16, 64>}]} {
    %c0 = arith.constant 0 : index
    %c0_0 = arith.constant 0 : index
    %0 = vector.load %arg1[%c0, %c0_0] : memref<16x784xf32, #tpu.memory_space<vmem>>, vector<16x784xf32>
    %1 = arith.truncf %0 : vector<16x784xf32> to vector<16x784xbf16>
    %c0_1 = arith.constant 0 : index
    %c0_2 = arith.constant 0 : index
    %2 = vector.load %arg2[%c0_1, %c0_2] : memref<784x128xbf16, #tpu.memory_space<vmem>>, vector<784x128xbf16>
    %cst = arith.constant dense<0.000000e+00> : vector<16x128xf32>
    %3 = tpu.matmul %1, %2, %cst {dimension_numbers = #tpu.dot_dimension_numbers<[1], [0], [0], [1], [0, 0, 1, 1], [], []>} : vector<16x784xbf16>, vector<784x128xbf16>, vector<16x128xf32> -> vector<16x128xf32>
    %c0_3 = arith.constant 0 : index
    %c0_4 = arith.constant 0 : index
    %4 = vector.load %arg3[%c0_3, %c0_4] : memref<1x128xf32, #tpu.memory_space<vmem>>, vector<1x128xf32>
    %5 = vector.broadcast %4 : vector<1x128xf32> to vector<16x128xf32>
    %6 = arith.addf %3, %5 : vector<16x128xf32>
    %7 = math.tanh %6 : vector<16x128xf32>
    %cst_5 = arith.constant 5.000000e-01 : f32
    %8 = vector.broadcast %cst_5 : f32 to vector<16x128xf32>
    %9 = arith.mulf %8, %7 : vector<16x128xf32>
    %cst_6 = arith.constant 5.000000e-01 : f32
    %10 = vector.broadcast %cst_6 : f32 to vector<16x128xf32>
    %11 = arith.addf %9, %10 : vector<16x128xf32>
    %12 = arith.truncf %11 : vector<16x128xf32> to vector<16x128xbf16>
    %c0_7 = arith.constant 0 : index
    %c0_8 = arith.constant 0 : index
    %13 = vector.load %arg4[%c0_7, %c0_8] : memref<128x128xbf16, #tpu.memory_space<vmem>>, vector<128x128xbf16>
    %cst_9 = arith.constant dense<0.000000e+00> : vector<16x128xf32>
    %14 = tpu.matmul %12, %13, %cst_9 {dimension_numbers = #tpu.dot_dimension_numbers<[1], [0], [0], [1], [0, 0, 1, 1], [], []>} : vector<16x128xbf16>, vector<128x128xbf16>, vector<16x128xf32> -> vector<16x128xf32>
    %c0_10 = arith.constant 0 : index
    %c0_11 = arith.constant 0 : index
    %15 = vector.load %arg5[%c0_10, %c0_11] : memref<1x128xf32, #tpu.memory_space<vmem>>, vector<1x128xf32>
    %16 = vector.broadcast %15 : vector<1x128xf32> to vector<16x128xf32>
    %17 = arith.addf %14, %16 : vector<16x128xf32>
    %18 = math.tanh %17 : vector<16x128xf32>
    %cst_12 = arith.constant 5.000000e-01 : f32
    %19 = vector.broadcast %cst_12 : f32 to vector<16x128xf32>
    %20 = arith.mulf %19, %18 : vector<16x128xf32>
    %cst_13 = arith.constant 5.000000e-01 : f32
    %21 = vector.broadcast %cst_13 : f32 to vector<16x128xf32>
    %22 = arith.addf %20, %21 : vector<16x128xf32>
    %23 = arith.truncf %22 : vector<16x128xf32> to vector<16x128xbf16>
    %c0_14 = arith.constant 0 : index
    %c0_15 = arith.constant 0 : index
    %24 = vector.load %arg6[%c0_14, %c0_15] : memref<128x128xbf16, #tpu.memory_space<vmem>>, vector<128x128xbf16>
    %cst_16 = arith.constant dense<0.000000e+00> : vector<16x128xf32>
    %25 = tpu.matmul %23, %24, %cst_16 {dimension_numbers = #tpu.dot_dimension_numbers<[1], [0], [0], [1], [0, 0, 1, 1], [], []>} : vector<16x128xbf16>, vector<128x128xbf16>, vector<16x128xf32> -> vector<16x128xf32>
    %c0_17 = arith.constant 0 : index
    %c0_18 = arith.constant 0 : index
    %26 = vector.load %arg7[%c0_17, %c0_18] : memref<1x128xf32, #tpu.memory_space<vmem>>, vector<1x128xf32>
    %27 = vector.broadcast %26 : vector<1x128xf32> to vector<16x128xf32>
    %28 = arith.addf %25, %27 : vector<16x128xf32>
    %29 = math.tanh %28 : vector<16x128xf32>
    %cst_19 = arith.constant 5.000000e-01 : f32
    %30 = vector.broadcast %cst_19 : f32 to vector<16x128xf32>
    %31 = arith.mulf %30, %29 : vector<16x128xf32>
    %cst_20 = arith.constant 5.000000e-01 : f32
    %32 = vector.broadcast %cst_20 : f32 to vector<16x128xf32>
    %33 = arith.addf %31, %32 : vector<16x128xf32>
    %34 = arith.truncf %33 : vector<16x128xf32> to vector<16x128xbf16>
    %c0_21 = arith.constant 0 : index
    %c0_22 = arith.constant 0 : index
    %35 = vector.load %arg8[%c0_21, %c0_22] : memref<128x784xbf16, #tpu.memory_space<vmem>>, vector<128x784xbf16>
    %cst_23 = arith.constant dense<0.000000e+00> : vector<16x784xf32>
    %36 = tpu.matmul %34, %35, %cst_23 {dimension_numbers = #tpu.dot_dimension_numbers<[1], [0], [0], [1], [0, 0, 1, 1], [], []>} : vector<16x128xbf16>, vector<128x784xbf16>, vector<16x784xf32> -> vector<16x784xf32>
    %c0_24 = arith.constant 0 : index
    %c0_25 = arith.constant 0 : index
    %37 = vector.load %arg9[%c0_24, %c0_25] : memref<1x784xf32, #tpu.memory_space<vmem>>, vector<1x784xf32>
    %38 = vector.broadcast %37 : vector<1x784xf32> to vector<16x784xf32>
    %39 = arith.addf %36, %38 : vector<16x784xf32>
    %40 = math.tanh %39 : vector<16x784xf32>
    %cst_26 = arith.constant 5.000000e-01 : f32
    %41 = vector.broadcast %cst_26 : f32 to vector<16x784xf32>
    %42 = arith.mulf %41, %40 : vector<16x784xf32>
    %cst_27 = arith.constant 5.000000e-01 : f32
    %43 = vector.broadcast %cst_27 : f32 to vector<16x784xf32>
    %44 = arith.addf %42, %43 : vector<16x784xf32>
    %45 = vector.extract_strided_slice %22 {offsets = [0, 0], sizes = [16, 64], strides = [1, 1]} : vector<16x128xf32> to vector<16x64xf32>
    %c0_28 = arith.constant 0 : index
    %c0_29 = arith.constant 0 : index
    %46 = vector.load %arg11[%c0_28, %c0_29] : memref<16x64xf32, #tpu.memory_space<vmem>>, vector<16x64xf32>
    tpu.vector_store %arg11[%c0_28, %c0_29], %45 {strides = array<i32>} : memref<16x64xf32, #tpu.memory_space<vmem>>, vector<16x64xf32>,
    %47 = arith.truncf %44 : vector<16x784xf32> to vector<16x784xbf16>
    %c0_30 = arith.constant 0 : index
    %c0_31 = arith.constant 0 : index
    %48 = vector.load %arg10[%c0_30, %c0_31] : memref<16x784xbf16, #tpu.memory_space<vmem>>, vector<16x784xbf16>
    tpu.vector_store %arg10[%c0_30, %c0_31], %47 {strides = array<i32>} : memref<16x784xbf16, #tpu.memory_space<vmem>>, vector<16x784xbf16>,
    return
  }
  func.func @transform_0(%arg0: i32) -> (i32, i32) {
    %c0_i32 = arith.constant 0 : i32
    %c0_i32_0 = arith.constant 0 : i32
    return %arg0, %c0_i32 : i32, i32
  }
  func.func @transform_1(%arg0: i32) -> (i32, i32) {
    %c0_i32 = arith.constant 0 : i32
    %c0_i32_0 = arith.constant 0 : i32
    %c0_i32_1 = arith.constant 0 : i32
    return %c0_i32, %c0_i32_0 : i32, i32
  }
  func.func @transform_2(%arg0: i32) -> (i32, i32) {
    %c0_i32 = arith.constant 0 : i32
    %c0_i32_0 = arith.constant 0 : i32
    %c0_i32_1 = arith.constant 0 : i32
    return %c0_i32, %c0_i32_0 : i32, i32
  }
  func.func @transform_3(%arg0: i32) -> (i32, i32) {
    %c0_i32 = arith.constant 0 : i32
    %c0_i32_0 = arith.constant 0 : i32
    %c0_i32_1 = arith.constant 0 : i32
    return %c0_i32, %c0_i32_0 : i32, i32
  }
  func.func @transform_4(%arg0: i32) -> (i32, i32) {
    %c0_i32 = arith.constant 0 : i32
    %c0_i32_0 = arith.constant 0 : i32
    %c0_i32_1 = arith.constant 0 : i32
    return %c0_i32, %c0_i32_0 : i32, i32
  }
  func.func @transform_5(%arg0: i32) -> (i32, i32) {
    %c0_i32 = arith.constant 0 : i32
    %c0_i32_0 = arith.constant 0 : i32
    %c0_i32_1 = arith.constant 0 : i32
    return %c0_i32, %c0_i32_0 : i32, i32
  }
  func.func @transform_6(%arg0: i32) -> (i32, i32) {
    %c0_i32 = arith.constant 0 : i32
    %c0_i32_0 = arith.constant 0 : i32
    %c0_i32_1 = arith.constant 0 : i32
    return %c0_i32, %c0_i32_0 : i32, i32
  }
  func.func @transform_7(%arg0: i32) -> (i32, i32) {
    %c0_i32 = arith.constant 0 : i32
    %c0_i32_0 = arith.constant 0 : i32
    %c0_i32_1 = arith.constant 0 : i32
    return %c0_i32, %c0_i32_0 : i32, i32
  }
  func.func @transform_8(%arg0: i32) -> (i32, i32) {
    %c0_i32 = arith.constant 0 : i32
    %c0_i32_0 = arith.constant 0 : i32
    %c0_i32_1 = arith.constant 0 : i32
    return %c0_i32, %c0_i32_0 : i32, i32
  }
  func.func @transform_9(%arg0: i32) -> (i32, i32) {
    %c0_i32 = arith.constant 0 : i32
    %c0_i32_0 = arith.constant 0 : i32
    return %arg0, %c0_i32 : i32, i32
  }
  func.func @transform_10(%arg0: i32) -> (i32, i32) {
    %c0_i32 = arith.constant 0 : i32
    %c0_i32_0 = arith.constant 0 : i32
    return %arg0, %c0_i32 : i32, i32
  }
}

</mosaic_0001>

<llo_original>
// kernel: autoencoder_forward.1
$region0: #{autoencoder_forward.1}
  #allocation0 [shape = 'u32[]', space=smem, size = 0x4, offset = 0x4, fixed_abs, tag = 'smem constant byte address 0x4 - core index']
  #allocation1 [shape = 'u32[144,128]{1,0:T(1,128)}', space=vmem, size = 0x12000, scoped, tag = 'internal scratch']
  %s0 = inlined_call_operand.vmem [shape: f32[16,784], index: 0, kind: input, shape index: {}]
  %s1 = inlined_call_operand.vmem [shape: bf16[784,128], index: 1, kind: input, shape index: {}]
  %s2 = inlined_call_operand.vmem [shape: f32[1,128], index: 2, kind: input, shape index: {}]
  %s3 = inlined_call_operand.vmem [shape: bf16[128,128], index: 3, kind: input, shape index: {}]
  %s4 = inlined_call_operand.vmem [shape: f32[1,128], index: 4, kind: input, shape index: {}]
  %s5 = inlined_call_operand.vmem [shape: bf16[128,128], index: 5, kind: input, shape index: {}]
  %s6 = inlined_call_operand.vmem [shape: f32[1,128], index: 6, kind: input, shape index: {}]
  %s7 = inlined_call_operand.vmem [shape: bf16[128,784], index: 7, kind: input, shape index: {}]
  %s8 = inlined_call_operand.vmem [shape: f32[1,784], index: 8, kind: input, shape index: {}]
  %s9 = inlined_call_operand.hbm [shape: bf16[16,784], index: 9, kind: output, shape index: {0}]
  %s10 = inlined_call_operand.hbm [shape: f32[16,64], index: 10, kind: output, shape index: {1}]
  %11 = xla_tuple %s9, %s10
  %s12 = sld [smem:[#allocation0]]
  $region54: #{autoencoder_forward.1} parent=0
    _
  %s14 = ssub.s32 1, %s12
  %s15 = scalar_select 0, %s14, %s12
  $region1: #{autoencoder_forward.1} parent=0
    #allocation2 [shape = 'u8[28672]{0}', space=vmem, size = 0x7000, scoped, tag = 'output window, operand 0, single buffered']
    #allocation3 [shape = 's32[1]{0}', space=sflag, size = 0x4, scoped, tag = 'scoped memory for autoencoder_forward.1']
    #allocation4 [shape = 'u8[8192]{0}', space=vmem, size = 0x2000, scoped, tag = 'output window, operand 1, single buffered']
    #allocation5 [shape = 's32[1]{0}', space=sflag, size = 0x4, scoped, tag = 'scoped memory for autoencoder_forward.1']
    %16 = vsyncpa [#allocation3], 0
    %17 = vsyncpa [#allocation5], 0
    // Predicated region
    $region2: #{autoencoder_forward.1} parent=1 // pred_check
      _
    $region3: #{autoencoder_forward.1} parent=1 // pred_check_branch
      %19 = sbr.rel (0) target = $region5
    $region4: #{autoencoder_forward.1} parent=1 // pred_region
      _
    $region5: #{autoencoder_forward.1} parent=1 // pred_fallthru
      _
    // Predicated region
    $region6: #{autoencoder_forward.1} parent=1 // pred_check
      _
    $region7: #{autoencoder_forward.1} parent=1 // pred_check_branch
      %21 = sbr.rel (0) target = $region9
    $region8: #{autoencoder_forward.1} parent=1 // pred_region
      _
    $region9: #{autoencoder_forward.1} parent=1 // pred_fallthru
      _
    // Predicated region
    $region10: #{autoencoder_forward.1} parent=1 // pred_check
      _
    $region11: #{autoencoder_forward.1} parent=1 // pred_check_branch
      %23 = sbr.rel (0) target = $region13
    $region12: #{autoencoder_forward.1} parent=1 // pred_region
      _
    $region13: #{autoencoder_forward.1} parent=1 // pred_fallthru
      _
    // Predicated region
    $region14: #{autoencoder_forward.1} parent=1 // pred_check
      _
    $region15: #{autoencoder_forward.1} parent=1 // pred_check_branch
      %25 = sbr.rel (0) target = $region17
    $region16: #{autoencoder_forward.1} parent=1 // pred_region
      _
    $region17: #{autoencoder_forward.1} parent=1 // pred_fallthru
      _
    // Predicated region
    $region18: #{autoencoder_forward.1} parent=1 // pred_check
      _
    $region19: #{autoencoder_forward.1} parent=1 // pred_check_branch
      %27 = sbr.rel (0) target = $region21
    $region20: #{autoencoder_forward.1} parent=1 // pred_region
      _
    $region21: #{autoencoder_forward.1} parent=1 // pred_fallthru
      _
    // Predicated region
    $region22: #{autoencoder_forward.1} parent=1 // pred_check
      _
    $region23: #{autoencoder_forward.1} parent=1 // pred_check_branch
      %29 = sbr.rel (0) target = $region25
    $region24: #{autoencoder_forward.1} parent=1 // pred_region
      _
    $region25: #{autoencoder_forward.1} parent=1 // pred_fallthru
      _
    // Predicated region
    $region26: #{autoencoder_forward.1} parent=1 // pred_check
      _
    $region27: #{autoencoder_forward.1} parent=1 // pred_check_branch
      %31 = sbr.rel (0) target = $region29
    $region28: #{autoencoder_forward.1} parent=1 // pred_region
      _
    $region29: #{autoencoder_forward.1} parent=1 // pred_fallthru
      _
    // Predicated region
    $region30: #{autoencoder_forward.1} parent=1 // pred_check
      _
    $region31: #{autoencoder_forward.1} parent=1 // pred_check_branch
      %33 = sbr.rel (0) target = $region33
    $region32: #{autoencoder_forward.1} parent=1 // pred_region
      _
    $region33: #{autoencoder_forward.1} parent=1 // pred_fallthru
      _
    // Predicated region
    $region34: #{autoencoder_forward.1} parent=1 // pred_check
      _
    $region35: #{autoencoder_forward.1} parent=1 // pred_check_branch
      %35 = sbr.rel (0) target = $region37
    $region36: #{autoencoder_forward.1} parent=1 // pred_region
      _
    $region37: #{autoencoder_forward.1} parent=1 // pred_fallthru
      _
    %v37 = vld [vmem:[%s0] sm:$0xff]
    %v38 = vld [vmem:[%s0 + $0x8] sm:$0xff]
    %v39 = vld [vmem:[%s0 + $0x10] sm:$0xff]
    %v40 = vld [vmem:[%s0 + $0x18] sm:$0xff]
    %v41 = vld [vmem:[%s0 + $0x20] sm:$0xff]
    %v42 = vld [vmem:[%s0 + $0x28] sm:$0xff]
    %v43 = vld [vmem:[%s0 + $0x30] sm:$0xff]
    %v44 = vld [vmem:[%s0 + $0x38] sm:$0xff]
    %v45 = vld [vmem:[%s0 + $0x40] sm:$0xff]
    %v46 = vld [vmem:[%s0 + $0x48] sm:$0xff]
    %v47 = vld [vmem:[%s0 + $0x50] sm:$0xff]
    %v48 = vld [vmem:[%s0 + $0x58] sm:$0xff]
    %v49 = vld [vmem:[%s0 + $0x60] sm:$0xff]
    %v50 = vld [vmem:[%s0 + $0x68] sm:$0xff]
    %v51 = vpack.c.bf16 %v44, %v37
    %v52 = vpack.c.bf16 %v45, %v38
    %v53 = vpack.c.bf16 %v46, %v39
    %v54 = vpack.c.bf16 %v47, %v40
    %v55 = vpack.c.bf16 %v48, %v41
    %v56 = vpack.c.bf16 %v49, %v42
    %v57 = vpack.c.bf16 %v50, %v43
    %v58 = vld [vmem:[%s1] sm:$0xf]
    %v59 = vld [vmem:[%s1 + $0x4] sm:$0xf]
    %v60 = vld [vmem:[%s1 + $0x8] sm:$0xf]
    %v61 = vld [vmem:[%s1 + $0xc] sm:$0xf]
    %v62 = vld [vmem:[%s1 + $0x10] sm:$0xf]
    %v63 = vld [vmem:[%s1 + $0x14] sm:$0xf]
    %v64 = vld [vmem:[%s1 + $0x18] sm:$0xf]
    %v65 = vld [vmem:[%s1 + $0x1c] sm:$0xf]
    %v66 = vld [vmem:[%s1 + $0x20] sm:$0xf]
    %v67 = vld [vmem:[%s1 + $0x24] sm:$0xf]
    %v68 = vld [vmem:[%s1 + $0x28] sm:$0xf]
    %v69 = vld [vmem:[%s1 + $0x2c] sm:$0xf]
    %v70 = vld [vmem:[%s1 + $0x30] sm:$0xf]
    %v71 = vld [vmem:[%s1 + $0x34] sm:$0xf]
    %v72 = vld [vmem:[%s1 + $0x38] sm:$0xf]
    %v73 = vld [vmem:[%s1 + $0x3c] sm:$0xf]
    %v74 = vld [vmem:[%s1 + $0x40] sm:$0xf]
    %v75 = vld [vmem:[%s1 + $0x44] sm:$0xf]
    %v76 = vld [vmem:[%s1 + $0x48] sm:$0xf]
    %v77 = vld [vmem:[%s1 + $0x4c] sm:$0xf]
    %v78 = vld [vmem:[%s1 + $0x50] sm:$0xf]
    %v79 = vld [vmem:[%s1 + $0x54] sm:$0xf]
    %v80 = vld [vmem:[%s1 + $0x58] sm:$0xf]
    %v81 = vld [vmem:[%s1 + $0x5c] sm:$0xf]
    %v82 = vld [vmem:[%s1 + $0x60] sm:$0xf]
    %v83 = vld [vmem:[%s1 + $0x64] sm:$0xf]
    %v84 = vld [vmem:[%s1 + $0x68] sm:$0xf]
    %v85 = vld [vmem:[%s1 + $0x6c] sm:$0xf]
    %v86 = vld [vmem:[%s1 + $0x70] sm:$0xf]
    %v87 = vld [vmem:[%s1 + $0x74] sm:$0xf]
    %v88 = vld [vmem:[%s1 + $0x78] sm:$0xf]
    %v89 = vld [vmem:[%s1 + $0x7c] sm:$0xf]
    %v90 = vld [vmem:[%s1 + $0x80] sm:$0xf]
    %v91 = vld [vmem:[%s1 + $0x84] sm:$0xf]
    %v92 = vld [vmem:[%s1 + $0x88] sm:$0xf]
    %v93 = vld [vmem:[%s1 + $0x8c] sm:$0xf]
    %v94 = vld [vmem:[%s1 + $0x90] sm:$0xf]
    %v95 = vld [vmem:[%s1 + $0x94] sm:$0xf]
    %v96 = vld [vmem:[%s1 + $0x98] sm:$0xf]
    %v97 = vld [vmem:[%s1 + $0x9c] sm:$0xf]
    %v98 = vld [vmem:[%s1 + $0xa0] sm:$0xf]
    %v99 = vld [vmem:[%s1 + $0xa4] sm:$0xf]
    %v100 = vld [vmem:[%s1 + $0xa8] sm:$0xf]
    %v101 = vld [vmem:[%s1 + $0xac] sm:$0xf]
    %v102 = vld [vmem:[%s1 + $0xb0] sm:$0xf]
    %v103 = vld [vmem:[%s1 + $0xb4] sm:$0xf]
    %v104 = vld [vmem:[%s1 + $0xb8] sm:$0xf]
    %v105 = vld [vmem:[%s1 + $0xbc] sm:$0xf]
    %v106 = vld [vmem:[%s1 + $0xc0] sm:$0xf]
    %v107 = vld [vmem:[%s1 + $0xc4] sm:$0xf]
    %v108 = vld [vmem:[%s1 + $0xc8] sm:$0xf]
    %v109 = vld [vmem:[%s1 + $0xcc] sm:$0xf]
    %v110 = vld [vmem:[%s1 + $0xd0] sm:$0xf]
    %v111 = vld [vmem:[%s1 + $0xd4] sm:$0xf]
    %v112 = vld [vmem:[%s1 + $0xd8] sm:$0xf]
    %v113 = vld [vmem:[%s1 + $0xdc] sm:$0xf]
    %v114 = vld [vmem:[%s1 + $0xe0] sm:$0xf]
    %v115 = vld [vmem:[%s1 + $0xe4] sm:$0xf]
    %v116 = vld [vmem:[%s1 + $0xe8] sm:$0xf]
    %v117 = vld [vmem:[%s1 + $0xec] sm:$0xf]
    %v118 = vld [vmem:[%s1 + $0xf0] sm:$0xf]
    %v119 = vld [vmem:[%s1 + $0xf4] sm:$0xf]
    %v120 = vld [vmem:[%s1 + $0xf8] sm:$0xf]
    %v121 = vld [vmem:[%s1 + $0xfc] sm:$0xf]
    %v122 = vld [vmem:[%s1 + $0x100] sm:$0xf]
    %v123 = vld [vmem:[%s1 + $0x104] sm:$0xf]
    %v124 = vld [vmem:[%s1 + $0x108] sm:$0xf]
    %v125 = vld [vmem:[%s1 + $0x10c] sm:$0xf]
    %v126 = vld [vmem:[%s1 + $0x110] sm:$0xf]
    %v127 = vld [vmem:[%s1 + $0x114] sm:$0xf]
    %v128 = vld [vmem:[%s1 + $0x118] sm:$0xf]
    %v129 = vld [vmem:[%s1 + $0x11c] sm:$0xf]
    %v130 = vld [vmem:[%s1 + $0x120] sm:$0xf]
    %v131 = vld [vmem:[%s1 + $0x124] sm:$0xf]
    %v132 = vld [vmem:[%s1 + $0x128] sm:$0xf]
    %v133 = vld [vmem:[%s1 + $0x12c] sm:$0xf]
    %v134 = vld [vmem:[%s1 + $0x130] sm:$0xf]
    %v135 = vld [vmem:[%s1 + $0x134] sm:$0xf]
    %v136 = vld [vmem:[%s1 + $0x138] sm:$0xf]
    %v137 = vld [vmem:[%s1 + $0x13c] sm:$0xf]
    %v138 = vld [vmem:[%s1 + $0x140] sm:$0xf]
    %v139 = vld [vmem:[%s1 + $0x144] sm:$0xf]
    %v140 = vld [vmem:[%s1 + $0x148] sm:$0xf]
    %v141 = vld [vmem:[%s1 + $0x14c] sm:$0xf]
    %v142 = vld [vmem:[%s1 + $0x150] sm:$0xf]
    %v143 = vld [vmem:[%s1 + $0x154] sm:$0xf]
    %v144 = vld [vmem:[%s1 + $0x158] sm:$0xf]
    %v145 = vld [vmem:[%s1 + $0x15c] sm:$0xf]
    %v146 = vld [vmem:[%s1 + $0x160] sm:$0xf]
    %v147 = vld [vmem:[%s1 + $0x164] sm:$0xf]
    %v148 = vld [vmem:[%s1 + $0x168] sm:$0xf]
    %v149 = vld [vmem:[%s1 + $0x16c] sm:$0xf]
    %v150 = vld [vmem:[%s1 + $0x170] sm:$0xf]
    %v151 = vld [vmem:[%s1 + $0x174] sm:$0xf]
    %v152 = vld [vmem:[%s1 + $0x178] sm:$0xf]
    %v153 = vld [vmem:[%s1 + $0x17c] sm:$0xf]
    %v154 = vld [vmem:[%s1 + $0x180] sm:$0xf]
    %v155 = vld [vmem:[%s1 + $0x184] sm:$0xf]
    %v156 = vld [vmem:[%s2] sm:$0x1]
    %v158 = vlaneseq
    %v159 = vshrl.u32 %v158, 7
    %v160 = vsub.s32 0, %v159
    %v161 = vrot.slane %v156, %v160
    %v261 = vunpack.c.l.b16 %v58
    %v262 = vunpack.c.l.b16 %v59
    %v263 = vunpack.c.l.b16 %v60
    %v264 = vunpack.c.l.b16 %v61
    %v265 = vunpack.c.l.b16 %v62
    %v266 = vunpack.c.l.b16 %v63
    %v267 = vunpack.c.l.b16 %v64
    %v268 = vunpack.c.l.b16 %v65
    %v269 = vunpack.c.l.b16 %v66
    %v270 = vunpack.c.l.b16 %v67
    %v271 = vunpack.c.l.b16 %v68
    %v272 = vunpack.c.l.b16 %v69
    %v273 = vunpack.c.l.b16 %v70
    %v274 = vunpack.c.l.b16 %v71
    %v275 = vunpack.c.l.b16 %v72
    %v276 = vunpack.c.l.b16 %v73
    %v277 = vunpack.c.l.b16 %v74
    %v278 = vunpack.c.l.b16 %v75
    %v279 = vunpack.c.l.b16 %v76
    %v280 = vunpack.c.l.b16 %v77
    %v281 = vunpack.c.l.b16 %v78
    %v282 = vunpack.c.l.b16 %v79
    %v283 = vunpack.c.l.b16 %v80
    %v284 = vunpack.c.l.b16 %v81
    %v285 = vunpack.c.l.b16 %v82
    %v286 = vunpack.c.l.b16 %v83
    %v287 = vunpack.c.l.b16 %v84
    %v288 = vunpack.c.l.b16 %v85
    %v289 = vunpack.c.l.b16 %v86
    %v290 = vunpack.c.l.b16 %v87
    %v291 = vunpack.c.l.b16 %v88
    %v292 = vunpack.c.l.b16 %v89
    %v293 = vunpack.c.l.b16 %v90
    %v294 = vunpack.c.l.b16 %v91
    %v295 = vunpack.c.l.b16 %v92
    %v296 = vunpack.c.l.b16 %v93
    %v297 = vunpack.c.l.b16 %v94
    %v298 = vunpack.c.l.b16 %v95
    %v299 = vunpack.c.l.b16 %v96
    %v300 = vunpack.c.l.b16 %v97
    %v301 = vunpack.c.l.b16 %v98
    %v302 = vunpack.c.l.b16 %v99
    %v303 = vunpack.c.l.b16 %v100
    %v304 = vunpack.c.l.b16 %v101
    %v305 = vunpack.c.l.b16 %v102
    %v306 = vunpack.c.l.b16 %v103
    %v307 = vunpack.c.l.b16 %v104
    %v308 = vunpack.c.l.b16 %v105
    %v309 = vunpack.c.l.b16 %v106
    %v310 = vunpack.c.l.b16 %v107
    %v311 = vunpack.c.l.b16 %v108
    %v312 = vunpack.c.l.b16 %v109
    %v313 = vunpack.c.l.b16 %v110
    %v314 = vunpack.c.l.b16 %v111
    %v315 = vunpack.c.l.b16 %v112
    %v316 = vunpack.c.l.b16 %v113
    %v317 = vunpack.c.l.b16 %v114
    %v318 = vunpack.c.l.b16 %v115
    %v319 = vunpack.c.l.b16 %v116
    %v320 = vunpack.c.l.b16 %v117
    %v321 = vunpack.c.l.b16 %v118
    %v322 = vunpack.c.l.b16 %v119
    %v323 = vunpack.c.l.b16 %v120
    %v324 = vunpack.c.l.b16 %v121
    %v325 = vunpack.c.l.b16 %v122
    %v326 = vunpack.c.l.b16 %v123
    %v327 = vunpack.c.l.b16 %v124
    %v328 = vunpack.c.l.b16 %v125
    %v329 = vunpack.c.l.b16 %v126
    %v330 = vunpack.c.l.b16 %v127
    %v331 = vunpack.c.l.b16 %v128
    %v332 = vunpack.c.l.b16 %v129
    %v333 = vunpack.c.l.b16 %v130
    %v334 = vunpack.c.l.b16 %v131
    %v335 = vunpack.c.l.b16 %v132
    %v336 = vunpack.c.l.b16 %v133
    %v337 = vunpack.c.l.b16 %v134
    %v338 = vunpack.c.l.b16 %v135
    %v339 = vunpack.c.l.b16 %v136
    %v340 = vunpack.c.l.b16 %v137
    %v341 = vunpack.c.l.b16 %v138
    %v342 = vunpack.c.l.b16 %v139
    %v343 = vunpack.c.l.b16 %v140
    %v344 = vunpack.c.l.b16 %v141
    %v345 = vunpack.c.l.b16 %v142
    %v346 = vunpack.c.l.b16 %v143
    %v347 = vunpack.c.l.b16 %v144
    %v348 = vunpack.c.l.b16 %v145
    %v349 = vunpack.c.l.b16 %v146
    %v350 = vunpack.c.l.b16 %v147
    %v351 = vunpack.c.l.b16 %v148
    %v352 = vunpack.c.l.b16 %v149
    %v353 = vunpack.c.l.b16 %v150
    %v354 = vunpack.c.l.b16 %v151
    %v355 = vunpack.c.l.b16 %v152
    %v356 = vunpack.c.l.b16 %v153
    %v357 = vunpack.c.l.b16 %v154
    %v358 = vunpack.c.l.b16 %v155
    %v359 = vpack.c.b16 %v262, %v261
    %v360 = vpack.c.b16 %v264, %v263
    %v361 = vpack.c.b16 %v266, %v265
    %v362 = vpack.c.b16 %v268, %v267
    %v363 = vpack.c.b16 %v270, %v269
    %v364 = vpack.c.b16 %v272, %v271
    %v365 = vpack.c.b16 %v274, %v273
    %v366 = vpack.c.b16 %v276, %v275
    %v367 = vpack.c.b16 %v278, %v277
    %v368 = vpack.c.b16 %v280, %v279
    %v369 = vpack.c.b16 %v282, %v281
    %v370 = vpack.c.b16 %v284, %v283
    %v371 = vpack.c.b16 %v286, %v285
    %v372 = vpack.c.b16 %v288, %v287
    %v373 = vpack.c.b16 %v290, %v289
    %v374 = vpack.c.b16 %v292, %v291
    %v375 = vpack.c.b16 %v294, %v293
    %v376 = vpack.c.b16 %v296, %v295
    %v377 = vpack.c.b16 %v298, %v297
    %v378 = vpack.c.b16 %v300, %v299
    %v379 = vpack.c.b16 %v302, %v301
    %v380 = vpack.c.b16 %v304, %v303
    %v381 = vpack.c.b16 %v306, %v305
    %v382 = vpack.c.b16 %v308, %v307
    %v383 = vpack.c.b16 %v310, %v309
    %v384 = vpack.c.b16 %v312, %v311
    %v385 = vpack.c.b16 %v314, %v313
    %v386 = vpack.c.b16 %v316, %v315
    %v387 = vpack.c.b16 %v318, %v317
    %v388 = vpack.c.b16 %v320, %v319
    %v389 = vpack.c.b16 %v322, %v321
    %v390 = vpack.c.b16 %v324, %v323
    %v391 = vpack.c.b16 %v326, %v325
    %v392 = vpack.c.b16 %v328, %v327
    %v393 = vpack.c.b16 %v330, %v329
    %v394 = vpack.c.b16 %v332, %v331
    %v395 = vpack.c.b16 %v334, %v333
    %v396 = vpack.c.b16 %v336, %v335
    %v397 = vpack.c.b16 %v338, %v337
    %v398 = vpack.c.b16 %v340, %v339
    %v399 = vpack.c.b16 %v342, %v341
    %v400 = vpack.c.b16 %v344, %v343
    %v401 = vpack.c.b16 %v346, %v345
    %v402 = vpack.c.b16 %v348, %v347
    %v403 = vpack.c.b16 %v350, %v349
    %v404 = vpack.c.b16 %v352, %v351
    %v405 = vpack.c.b16 %v354, %v353
    %v406 = vpack.c.b16 %v356, %v355
    %v407 = vpack.c.b16 %v358, %v357
    %vm457 = vcmask 130048
    %v459 = vsel %vm457, %v57, 0
    %461 = vmatprep.subr.bf16.mxu0 0
    %462 = vmatpush1.bf16.msra.mxu0 %v366
    %463 = vmatprep.subr.bf16.mxu0 0
    %464 = vmatpush1.bf16.msra.mxu0 %v365
    %465 = vmatprep.subr.bf16.mxu0 0
    %466 = vmatpush1.bf16.msra.mxu0 %v364
    %467 = vmatprep.subr.bf16.mxu0 0
    %468 = vmatpush1.bf16.msra.mxu0 %v363
    %469 = vmatprep.subr.bf16.mxu0 0
    %470 = vmatpush1.bf16.msra.mxu0 %v362
    %471 = vmatprep.subr.bf16.mxu0 0
    %472 = vmatpush1.bf16.msra.mxu0 %v361
    %473 = vmatprep.subr.bf16.mxu0 0
    %474 = vmatpush1.bf16.msra.mxu0 %v360
    %475 = vmatprep.subr.bf16.mxu0 0
    %476 = vmatpush1.bf16.msra.mxu0 %v359
    %477 = vmatprep.subr.bf16.mxu0 0
    %478 = vmatpush2.bf16.msra.mxu0 %v374
    %479 = vmatprep.subr.bf16.mxu0 0
    %480 = vmatpush2.bf16.msra.mxu0 %v373
    %481 = vmatprep.subr.bf16.mxu0 0
    %482 = vmatpush2.bf16.msra.mxu0 %v372
    %483 = vmatprep.subr.bf16.mxu0 0
    %484 = vmatpush2.bf16.msra.mxu0 %v371
    %485 = vmatprep.subr.bf16.mxu0 0
    %486 = vmatpush2.bf16.msra.mxu0 %v370
    %487 = vmatprep.subr.bf16.mxu0 0
    %488 = vmatpush2.bf16.msra.mxu0 %v369
    %489 = vmatprep.subr.bf16.mxu0 0
    %490 = vmatpush2.bf16.msra.mxu0 %v368
    %491 = vmatprep.subr.bf16.mxu0 0
    %492 = vmatpush2.bf16.msra.mxu0 %v367
    %493 = vmatprep.mubr.bf16.mxu0 %v52
    %494 = vmatmul.mubr.bf16.gmra.mxu0 %v51
    %v495 = vpop.f32.mrf.mxu0
    %v496 = vadd.f32 %v161, %v495
    %v497 = vpop.f32.mrf.mxu0
    %v498 = vpop.f32.mrf.mxu0
    %v499 = vadd.f32 %v161, %v498
    %v500 = vpop.f32.mrf.mxu0
    %501 = vdwg.mxu0
    %502 = vmatprep.subr.bf16.mxu0 0
    %503 = vmatpush1.bf16.msra.mxu0 %v382
    %504 = vmatprep.subr.bf16.mxu0 0
    %505 = vmatpush1.bf16.msra.mxu0 %v381
    %506 = vmatprep.subr.bf16.mxu0 0
    %507 = vmatpush1.bf16.msra.mxu0 %v380
    %508 = vmatprep.subr.bf16.mxu0 0
    %509 = vmatpush1.bf16.msra.mxu0 %v379
    %510 = vmatprep.subr.bf16.mxu0 0
    %511 = vmatpush1.bf16.msra.mxu0 %v378
    %512 = vmatprep.subr.bf16.mxu0 0
    %513 = vmatpush1.bf16.msra.mxu0 %v377
    %514 = vmatprep.subr.bf16.mxu0 0
    %515 = vmatpush1.bf16.msra.mxu0 %v376
    %516 = vmatprep.subr.bf16.mxu0 0
    %517 = vmatpush1.bf16.msra.mxu0 %v375
    %518 = vmatprep.subr.bf16.mxu0 0
    %519 = vmatpush2.bf16.msra.mxu0 %v390
    %520 = vmatprep.subr.bf16.mxu0 0
    %521 = vmatpush2.bf16.msra.mxu0 %v389
    %522 = vmatprep.subr.bf16.mxu0 0
    %523 = vmatpush2.bf16.msra.mxu0 %v388
    %524 = vmatprep.subr.bf16.mxu0 0
    %525 = vmatpush2.bf16.msra.mxu0 %v387
    %526 = vmatprep.subr.bf16.mxu0 0
    %527 = vmatpush2.bf16.msra.mxu0 %v386
    %528 = vmatprep.subr.bf16.mxu0 0
    %529 = vmatpush2.bf16.msra.mxu0 %v385
    %530 = vmatprep.subr.bf16.mxu0 0
    %531 = vmatpush2.bf16.msra.mxu0 %v384
    %532 = vmatprep.subr.bf16.mxu0 0
    %533 = vmatpush2.bf16.msra.mxu0 %v383
    %534 = vmatprep.mubr.bf16.mxu0 %v54
    %535 = vmatmul.mubr.bf16.gmra.mxu0 %v53
    %v536 = vpop.f32.mrf.mxu0
    %v537 = vadd.f32 %v496, %v536
    %v538 = vpop.f32.mrf.mxu0
    %v539 = vpop.f32.mrf.mxu0
    %v540 = vadd.f32 %v499, %v539
    %v541 = vpop.f32.mrf.mxu0
    %542 = vdwg.mxu0
    %543 = vmatprep.subr.bf16.mxu0 0
    %544 = vmatpush1.bf16.msra.mxu0 %v398
    %545 = vmatprep.subr.bf16.mxu0 0
    %546 = vmatpush1.bf16.msra.mxu0 %v397
    %547 = vmatprep.subr.bf16.mxu0 0
    %548 = vmatpush1.bf16.msra.mxu0 %v396
    %549 = vmatprep.subr.bf16.mxu0 0
    %550 = vmatpush1.bf16.msra.mxu0 %v395
    %551 = vmatprep.subr.bf16.mxu0 0
    %552 = vmatpush1.bf16.msra.mxu0 %v394
    %553 = vmatprep.subr.bf16.mxu0 0
    %554 = vmatpush1.bf16.msra.mxu0 %v393
    %555 = vmatprep.subr.bf16.mxu0 0
    %556 = vmatpush1.bf16.msra.mxu0 %v392
    %557 = vmatprep.subr.bf16.mxu0 0
    %558 = vmatpush1.bf16.msra.mxu0 %v391
    %559 = vmatprep.subr.bf16.mxu0 0
    %560 = vmatpush2.bf16.msra.mxu0 %v406
    %561 = vmatprep.subr.bf16.mxu0 0
    %562 = vmatpush2.bf16.msra.mxu0 %v405
    %563 = vmatprep.subr.bf16.mxu0 0
    %564 = vmatpush2.bf16.msra.mxu0 %v404
    %565 = vmatprep.subr.bf16.mxu0 0
    %566 = vmatpush2.bf16.msra.mxu0 %v403
    %567 = vmatprep.subr.bf16.mxu0 0
    %568 = vmatpush2.bf16.msra.mxu0 %v402
    %569 = vmatprep.subr.bf16.mxu0 0
    %570 = vmatpush2.bf16.msra.mxu0 %v401
    %571 = vmatprep.subr.bf16.mxu0 0
    %572 = vmatpush2.bf16.msra.mxu0 %v400
    %573 = vmatprep.subr.bf16.mxu0 0
    %574 = vmatpush2.bf16.msra.mxu0 %v399
    %575 = vmatprep.mubr.bf16.mxu0 %v56
    %576 = vmatmul.mubr.bf16.gmra.mxu0 %v55
    %v577 = vpop.f32.mrf.mxu0
    %v578 = vadd.f32 %v537, %v577
    %v579 = vpop.f32.mrf.mxu0
    %v580 = vpop.f32.mrf.mxu0
    %v581 = vadd.f32 %v540, %v580
    %v582 = vpop.f32.mrf.mxu0
    %583 = vdwg.mxu0
    %584 = vmatprep.subr.bf16.mxu0 0
    %585 = vmatpush1.bf16.msra.mxu0 0
    %586 = vmatprep.subr.bf16.mxu0 0
    %587 = vmatpush1.bf16.msra.mxu0 0
    %588 = vmatprep.subr.bf16.mxu0 0
    %589 = vmatpush1.bf16.msra.mxu0 0
    %590 = vmatprep.subr.bf16.mxu0 0
    %591 = vmatpush1.bf16.msra.mxu0 0
    %592 = vmatprep.subr.bf16.mxu0 0
    %593 = vmatpush1.bf16.msra.mxu0 0
    %594 = vmatprep.subr.bf16.mxu0 0
    %595 = vmatpush1.bf16.msra.mxu0 0
    %596 = vmatprep.subr.bf16.mxu0 0
    %597 = vmatpush1.bf16.msra.mxu0 0
    %598 = vmatprep.subr.bf16.mxu0 0
    %599 = vmatpush1.bf16.msra.mxu0 %v407
    %600 = vmatprep.subr.bf16.mxu0 0
    %601 = vmatpush2.bf16.msra.mxu0 0
    %602 = vmatprep.subr.bf16.mxu0 0
    %603 = vmatpush2.bf16.msra.mxu0 0
    %604 = vmatprep.subr.bf16.mxu0 0
    %605 = vmatpush2.bf16.msra.mxu0 0
    %606 = vmatprep.subr.bf16.mxu0 0
    %607 = vmatpush2.bf16.msra.mxu0 0
    %608 = vmatprep.subr.bf16.mxu0 0
    %609 = vmatpush2.bf16.msra.mxu0 0
    %610 = vmatprep.subr.bf16.mxu0 0
    %611 = vmatpush2.bf16.msra.mxu0 0
    %612 = vmatprep.subr.bf16.mxu0 0
    %613 = vmatpush2.bf16.msra.mxu0 0
    %614 = vmatprep.subr.bf16.mxu0 0
    %615 = vmatpush2.bf16.msra.mxu0 0
    %616 = vmatprep.mubr.bf16.mxu0 0
    %617 = vmatmul.mubr.bf16.gmra.mxu0 %v459
    %v618 = vpop.f32.mrf.mxu0
    %v619 = vadd.f32 %v578, %v618
    %v620 = vpop.f32.mrf.mxu0
    %v621 = vpop.f32.mrf.mxu0
    %v622 = vadd.f32 %v581, %v621
    %v623 = vpop.f32.mrf.mxu0
    %624 = vdwg.mxu0
    %v625 = vtanh.pop %v619
    %v626 = vtanh.pop %v622
    %v627 = vmul.f32 %v625, 0.5
    %v628 = vmul.f32 %v626, 0.5
    %v629 = vadd.f32 %v627, 0.5
    %v630 = vadd.f32 %v628, 0.5
    %v631 = vpack.c.bf16 %v630, %v629
    %v632 = vld [vmem:[%s3] sm:$0xf]
    %v633 = vld [vmem:[%s3 + $0x4] sm:$0xf]
    %v634 = vld [vmem:[%s3 + $0x8] sm:$0xf]
    %v635 = vld [vmem:[%s3 + $0xc] sm:$0xf]
    %v636 = vld [vmem:[%s3 + $0x10] sm:$0xf]
    %v637 = vld [vmem:[%s3 + $0x14] sm:$0xf]
    %v638 = vld [vmem:[%s3 + $0x18] sm:$0xf]
    %v639 = vld [vmem:[%s3 + $0x1c] sm:$0xf]
    %v640 = vld [vmem:[%s3 + $0x20] sm:$0xf]
    %v641 = vld [vmem:[%s3 + $0x24] sm:$0xf]
    %v642 = vld [vmem:[%s3 + $0x28] sm:$0xf]
    %v643 = vld [vmem:[%s3 + $0x2c] sm:$0xf]
    %v644 = vld [vmem:[%s3 + $0x30] sm:$0xf]
    %v645 = vld [vmem:[%s3 + $0x34] sm:$0xf]
    %v646 = vld [vmem:[%s3 + $0x38] sm:$0xf]
    %v647 = vld [vmem:[%s3 + $0x3c] sm:$0xf]
    %v648 = vld [vmem:[%s4] sm:$0x1]
    %v650 = vlaneseq
    %v651 = vshrl.u32 %v650, 7
    %v652 = vsub.s32 0, %v651
    %v653 = vrot.slane %v648, %v652
    %v671 = vunpack.c.l.b16 %v632
    %v672 = vunpack.c.l.b16 %v633
    %v673 = vunpack.c.l.b16 %v634
    %v674 = vunpack.c.l.b16 %v635
    %v675 = vunpack.c.l.b16 %v636
    %v676 = vunpack.c.l.b16 %v637
    %v677 = vunpack.c.l.b16 %v638
    %v678 = vunpack.c.l.b16 %v639
    %v679 = vunpack.c.l.b16 %v640
    %v680 = vunpack.c.l.b16 %v641
    %v681 = vunpack.c.l.b16 %v642
    %v682 = vunpack.c.l.b16 %v643
    %v683 = vunpack.c.l.b16 %v644
    %v684 = vunpack.c.l.b16 %v645
    %v685 = vunpack.c.l.b16 %v646
    %v686 = vunpack.c.l.b16 %v647
    %v687 = vpack.c.b16 %v672, %v671
    %v688 = vpack.c.b16 %v674, %v673
    %v689 = vpack.c.b16 %v676, %v675
    %v690 = vpack.c.b16 %v678, %v677
    %v691 = vpack.c.b16 %v680, %v679
    %v692 = vpack.c.b16 %v682, %v681
    %v693 = vpack.c.b16 %v684, %v683
    %v694 = vpack.c.b16 %v686, %v685
    %703 = vmatprep.subr.bf16.mxu0 0
    %704 = vmatpush1.bf16.msra.mxu0 %v694
    %705 = vmatprep.subr.bf16.mxu0 0
    %706 = vmatpush1.bf16.msra.mxu0 %v693
    %707 = vmatprep.subr.bf16.mxu0 0
    %708 = vmatpush1.bf16.msra.mxu0 %v692
    %709 = vmatprep.subr.bf16.mxu0 0
    %710 = vmatpush1.bf16.msra.mxu0 %v691
    %711 = vmatprep.subr.bf16.mxu0 0
    %712 = vmatpush1.bf16.msra.mxu0 %v690
    %713 = vmatprep.subr.bf16.mxu0 0
    %714 = vmatpush1.bf16.msra.mxu0 %v689
    %715 = vmatprep.subr.bf16.mxu0 0
    %716 = vmatpush1.bf16.msra.mxu0 %v688
    %717 = vmatprep.subr.bf16.mxu0 0
    %718 = vmatpush1.bf16.msra.mxu0 %v687
    %719 = vmatprep.subr.bf16.mxu0 0
    %720 = vmatpush2.bf16.msra.mxu0 0
    %721 = vmatprep.subr.bf16.mxu0 0
    %722 = vmatpush2.bf16.msra.mxu0 0
    %723 = vmatprep.subr.bf16.mxu0 0
    %724 = vmatpush2.bf16.msra.mxu0 0
    %725 = vmatprep.subr.bf16.mxu0 0
    %726 = vmatpush2.bf16.msra.mxu0 0
    %727 = vmatprep.subr.bf16.mxu0 0
    %728 = vmatpush2.bf16.msra.mxu0 0
    %729 = vmatprep.subr.bf16.mxu0 0
    %730 = vmatpush2.bf16.msra.mxu0 0
    %731 = vmatprep.subr.bf16.mxu0 0
    %732 = vmatpush2.bf16.msra.mxu0 0
    %733 = vmatprep.subr.bf16.mxu0 0
    %734 = vmatpush2.bf16.msra.mxu0 0
    %735 = vmatprep.mubr.bf16.mxu0 0
    %736 = vmatmul.mubr.bf16.gmra.mxu0 %v631
    %v737 = vpop.f32.mrf.mxu0
    %v738 = vadd.f32 %v653, %v737
    %v739 = vpop.f32.mrf.mxu0
    %v740 = vpop.f32.mrf.mxu0
    %v741 = vadd.f32 %v653, %v740
    %v742 = vpop.f32.mrf.mxu0
    %743 = vdwg.mxu0
    %v744 = vtanh.pop %v738
    %v745 = vtanh.pop %v741
    %v746 = vmul.f32 %v744, 0.5
    %v747 = vmul.f32 %v745, 0.5
    %v748 = vadd.f32 %v746, 0.5
    %v749 = vadd.f32 %v747, 0.5
    %v750 = vpack.c.bf16 %v749, %v748
    %v751 = vld [vmem:[%s5] sm:$0xf]
    %v752 = vld [vmem:[%s5 + $0x4] sm:$0xf]
    %v753 = vld [vmem:[%s5 + $0x8] sm:$0xf]
    %v754 = vld [vmem:[%s5 + $0xc] sm:$0xf]
    %v755 = vld [vmem:[%s5 + $0x10] sm:$0xf]
    %v756 = vld [vmem:[%s5 + $0x14] sm:$0xf]
    %v757 = vld [vmem:[%s5 + $0x18] sm:$0xf]
    %v758 = vld [vmem:[%s5 + $0x1c] sm:$0xf]
    %v759 = vld [vmem:[%s5 + $0x20] sm:$0xf]
    %v760 = vld [vmem:[%s5 + $0x24] sm:$0xf]
    %v761 = vld [vmem:[%s5 + $0x28] sm:$0xf]
    %v762 = vld [vmem:[%s5 + $0x2c] sm:$0xf]
    %v763 = vld [vmem:[%s5 + $0x30] sm:$0xf]
    %v764 = vld [vmem:[%s5 + $0x34] sm:$0xf]
    %v765 = vld [vmem:[%s5 + $0x38] sm:$0xf]
    %v766 = vld [vmem:[%s5 + $0x3c] sm:$0xf]
    %v767 = vld [vmem:[%s6] sm:$0x1]
    %v769 = vlaneseq
    %v770 = vshrl.u32 %v769, 7
    %v771 = vsub.s32 0, %v770
    %v772 = vrot.slane %v767, %v771
    %v790 = vunpack.c.l.b16 %v751
    %v791 = vunpack.c.l.b16 %v752
    %v792 = vunpack.c.l.b16 %v753
    %v793 = vunpack.c.l.b16 %v754
    %v794 = vunpack.c.l.b16 %v755
    %v795 = vunpack.c.l.b16 %v756
    %v796 = vunpack.c.l.b16 %v757
    %v797 = vunpack.c.l.b16 %v758
    %v798 = vunpack.c.l.b16 %v759
    %v799 = vunpack.c.l.b16 %v760
    %v800 = vunpack.c.l.b16 %v761
    %v801 = vunpack.c.l.b16 %v762
    %v802 = vunpack.c.l.b16 %v763
    %v803 = vunpack.c.l.b16 %v764
    %v804 = vunpack.c.l.b16 %v765
    %v805 = vunpack.c.l.b16 %v766
    %v806 = vpack.c.b16 %v791, %v790
    %v807 = vpack.c.b16 %v793, %v792
    %v808 = vpack.c.b16 %v795, %v794
    %v809 = vpack.c.b16 %v797, %v796
    %v810 = vpack.c.b16 %v799, %v798
    %v811 = vpack.c.b16 %v801, %v800
    %v812 = vpack.c.b16 %v803, %v802
    %v813 = vpack.c.b16 %v805, %v804
    %822 = vmatprep.subr.bf16.mxu0 0
    %823 = vmatpush1.bf16.msra.mxu0 %v813
    %824 = vmatprep.subr.bf16.mxu0 0
    %825 = vmatpush1.bf16.msra.mxu0 %v812
    %826 = vmatprep.subr.bf16.mxu0 0
    %827 = vmatpush1.bf16.msra.mxu0 %v811
    %828 = vmatprep.subr.bf16.mxu0 0
    %829 = vmatpush1.bf16.msra.mxu0 %v810
    %830 = vmatprep.subr.bf16.mxu0 0
    %831 = vmatpush1.bf16.msra.mxu0 %v809
    %832 = vmatprep.subr.bf16.mxu0 0
    %833 = vmatpush1.bf16.msra.mxu0 %v808
    %834 = vmatprep.subr.bf16.mxu0 0
    %835 = vmatpush1.bf16.msra.mxu0 %v807
    %836 = vmatprep.subr.bf16.mxu0 0
    %837 = vmatpush1.bf16.msra.mxu0 %v806
    %838 = vmatprep.subr.bf16.mxu0 0
    %839 = vmatpush2.bf16.msra.mxu0 0
    %840 = vmatprep.subr.bf16.mxu0 0
    %841 = vmatpush2.bf16.msra.mxu0 0
    %842 = vmatprep.subr.bf16.mxu0 0
    %843 = vmatpush2.bf16.msra.mxu0 0
    %844 = vmatprep.subr.bf16.mxu0 0
    %845 = vmatpush2.bf16.msra.mxu0 0
    %846 = vmatprep.subr.bf16.mxu0 0
    %847 = vmatpush2.bf16.msra.mxu0 0
    %848 = vmatprep.subr.bf16.mxu0 0
    %849 = vmatpush2.bf16.msra.mxu0 0
    %850 = vmatprep.subr.bf16.mxu0 0
    %851 = vmatpush2.bf16.msra.mxu0 0
    %852 = vmatprep.subr.bf16.mxu0 0
    %853 = vmatpush2.bf16.msra.mxu0 0
    %854 = vmatprep.mubr.bf16.mxu0 0
    %855 = vmatmul.mubr.bf16.gmra.mxu0 %v750
    %v856 = vpop.f32.mrf.mxu0
    %v857 = vadd.f32 %v772, %v856
    %v858 = vpop.f32.mrf.mxu0
    %v859 = vpop.f32.mrf.mxu0
    %v860 = vadd.f32 %v772, %v859
    %v861 = vpop.f32.mrf.mxu0
    %862 = vdwg.mxu0
    %v863 = vtanh.pop %v857
    %v864 = vtanh.pop %v860
    %v865 = vmul.f32 %v863, 0.5
    %v866 = vmul.f32 %v864, 0.5
    %v867 = vadd.f32 %v865, 0.5
    %v868 = vadd.f32 %v866, 0.5
    %v869 = vpack.c.bf16 %v868, %v867
    %v870 = vld [vmem:[%s7] sm:$0xff]
    %v871 = vld [vmem:[%s7 + $0x8] sm:$0xff]
    %v872 = vld [vmem:[%s7 + $0x10] sm:$0xff]
    %v873 = vld [vmem:[%s7 + $0x18] sm:$0xf]
    %v874 = vld [vmem:[%s7 + $0x1c] sm:$0xff]
    %v875 = vld [vmem:[%s7 + $0x24] sm:$0xff]
    %v876 = vld [vmem:[%s7 + $0x2c] sm:$0xff]
    %v877 = vld [vmem:[%s7 + $0x34] sm:$0xf]
    %v878 = vld [vmem:[%s7 + $0x38] sm:$0xff]
    %v879 = vld [vmem:[%s7 + $0x40] sm:$0xff]
    %v880 = vld [vmem:[%s7 + $0x48] sm:$0xff]
    %v881 = vld [vmem:[%s7 + $0x50] sm:$0xf]
    %v882 = vld [vmem:[%s7 + $0x54] sm:$0xff]
    %v883 = vld [vmem:[%s7 + $0x5c] sm:$0xff]
    %v884 = vld [vmem:[%s7 + $0x64] sm:$0xff]
    %v885 = vld [vmem:[%s7 + $0x6c] sm:$0xf]
    %v886 = vld [vmem:[%s7 + $0x70] sm:$0xff]
    %v887 = vld [vmem:[%s7 + $0x78] sm:$0xff]
    %v888 = vld [vmem:[%s7 + $0x80] sm:$0xff]
    %v889 = vld [vmem:[%s7 + $0x88] sm:$0xf]
    %v890 = vld [vmem:[%s7 + $0x8c] sm:$0xff]
    %v891 = vld [vmem:[%s7 + $0x94] sm:$0xff]
    %v892 = vld [vmem:[%s7 + $0x9c] sm:$0xff]
    %v893 = vld [vmem:[%s7 + $0xa4] sm:$0xf]
    %v894 = vld [vmem:[%s7 + $0xa8] sm:$0xff]
    %v895 = vld [vmem:[%s7 + $0xb0] sm:$0xff]
    %v896 = vld [vmem:[%s7 + $0xb8] sm:$0xff]
    %v897 = vld [vmem:[%s7 + $0xc0] sm:$0xf]
    %v898 = vld [vmem:[%s7 + $0xc4] sm:$0xff]
    %v899 = vld [vmem:[%s7 + $0xcc] sm:$0xff]
    %v900 = vld [vmem:[%s7 + $0xd4] sm:$0xff]
    %v901 = vld [vmem:[%s7 + $0xdc] sm:$0xf]
    %v902 = vld [vmem:[%s7 + $0xe0] sm:$0xff]
    %v903 = vld [vmem:[%s7 + $0xe8] sm:$0xff]
    %v904 = vld [vmem:[%s7 + $0xf0] sm:$0xff]
    %v905 = vld [vmem:[%s7 + $0xf8] sm:$0xf]
    %v906 = vld [vmem:[%s7 + $0xfc] sm:$0xff]
    %v907 = vld [vmem:[%s7 + $0x104] sm:$0xff]
    %v908 = vld [vmem:[%s7 + $0x10c] sm:$0xff]
    %v909 = vld [vmem:[%s7 + $0x114] sm:$0xf]
    %v910 = vld [vmem:[%s7 + $0x118] sm:$0xff]
    %v911 = vld [vmem:[%s7 + $0x120] sm:$0xff]
    %v912 = vld [vmem:[%s7 + $0x128] sm:$0xff]
    %v913 = vld [vmem:[%s7 + $0x130] sm:$0xf]
    %v914 = vld [vmem:[%s7 + $0x134] sm:$0xff]
    %v915 = vld [vmem:[%s7 + $0x13c] sm:$0xff]
    %v916 = vld [vmem:[%s7 + $0x144] sm:$0xff]
    %v917 = vld [vmem:[%s7 + $0x14c] sm:$0xf]
    %v918 = vld [vmem:[%s7 + $0x150] sm:$0xff]
    %v919 = vld [vmem:[%s7 + $0x158] sm:$0xff]
    %v920 = vld [vmem:[%s7 + $0x160] sm:$0xff]
    %v921 = vld [vmem:[%s7 + $0x168] sm:$0xf]
    %v922 = vld [vmem:[%s7 + $0x16c] sm:$0xff]
    %v923 = vld [vmem:[%s7 + $0x174] sm:$0xff]
    %v924 = vld [vmem:[%s7 + $0x17c] sm:$0xff]
    %v925 = vld [vmem:[%s7 + $0x184] sm:$0xf]
    %v926 = vld [vmem:[%s7 + $0x188] sm:$0xff]
    %v927 = vld [vmem:[%s7 + $0x190] sm:$0xff]
    %v928 = vld [vmem:[%s7 + $0x198] sm:$0xff]
    %v929 = vld [vmem:[%s7 + $0x1a0] sm:$0xf]
    %v930 = vld [vmem:[%s7 + $0x1a4] sm:$0xff]
    %v931 = vld [vmem:[%s7 + $0x1ac] sm:$0xff]
    %v932 = vld [vmem:[%s7 + $0x1b4] sm:$0xff]
    %v933 = vld [vmem:[%s7 + $0x1bc] sm:$0xf]
    %v934 = vld [vmem:[%s8] sm:$0x7f]
    %v936 = vlaneseq
    %v937 = vshrl.u32 %v936, 7
    %v938 = vsub.s32 0, %v937
    %v939 = vrot.slane %v934, %v938
    %v940 = vlaneseq
    %v941 = vshrl.u32 %v940, 7
    %v942 = vsub.s32 1, %v941
    %v943 = vrot.slane %v934, %v942
    %v944 = vlaneseq
    %v945 = vshrl.u32 %v944, 7
    %v946 = vsub.s32 2, %v945
    %v947 = vrot.slane %v934, %v946
    %v948 = vlaneseq
    %v949 = vshrl.u32 %v948, 7
    %v950 = vsub.s32 3, %v949
    %v951 = vrot.slane %v934, %v950
    %v952 = vlaneseq
    %v953 = vshrl.u32 %v952, 7
    %v954 = vsub.s32 4, %v953
    %v955 = vrot.slane %v934, %v954
    %v956 = vlaneseq
    %v957 = vshrl.u32 %v956, 7
    %v958 = vsub.s32 5, %v957
    %v959 = vrot.slane %v934, %v958
    %v960 = vlaneseq
    %v961 = vshrl.u32 %v960, 7
    %v962 = vsub.s32 6, %v961
    %v963 = vrot.slane %v934, %v962
    %v1035 = vunpack.c.l.b16 %v870
    %v1036 = vunpack.c.h.b16 %v870
    %v1037 = vunpack.c.l.b16 %v871
    %v1038 = vunpack.c.h.b16 %v871
    %v1039 = vunpack.c.l.b16 %v872
    %v1040 = vunpack.c.h.b16 %v872
    %v1041 = vunpack.c.l.b16 %v873
    %v1042 = vunpack.c.l.b16 %v874
    %v1043 = vunpack.c.h.b16 %v874
    %v1044 = vunpack.c.l.b16 %v875
    %v1045 = vunpack.c.h.b16 %v875
    %v1046 = vunpack.c.l.b16 %v876
    %v1047 = vunpack.c.h.b16 %v876
    %v1048 = vunpack.c.l.b16 %v877
    %v1049 = vunpack.c.l.b16 %v878
    %v1050 = vunpack.c.h.b16 %v878
    %v1051 = vunpack.c.l.b16 %v879
    %v1052 = vunpack.c.h.b16 %v879
    %v1053 = vunpack.c.l.b16 %v880
    %v1054 = vunpack.c.h.b16 %v880
    %v1055 = vunpack.c.l.b16 %v881
    %v1056 = vunpack.c.l.b16 %v882
    %v1057 = vunpack.c.h.b16 %v882
    %v1058 = vunpack.c.l.b16 %v883
    %v1059 = vunpack.c.h.b16 %v883
    %v1060 = vunpack.c.l.b16 %v884
    %v1061 = vunpack.c.h.b16 %v884
    %v1062 = vunpack.c.l.b16 %v885
    %v1063 = vunpack.c.l.b16 %v886
    %v1064 = vunpack.c.h.b16 %v886
    %v1065 = vunpack.c.l.b16 %v887
    %v1066 = vunpack.c.h.b16 %v887
    %v1067 = vunpack.c.l.b16 %v888
    %v1068 = vunpack.c.h.b16 %v888
    %v1069 = vunpack.c.l.b16 %v889
    %v1070 = vunpack.c.l.b16 %v890
    %v1071 = vunpack.c.h.b16 %v890
    %v1072 = vunpack.c.l.b16 %v891
    %v1073 = vunpack.c.h.b16 %v891
    %v1074 = vunpack.c.l.b16 %v892
    %v1075 = vunpack.c.h.b16 %v892
    %v1076 = vunpack.c.l.b16 %v893
    %v1077 = vunpack.c.l.b16 %v894
    %v1078 = vunpack.c.h.b16 %v894
    %v1079 = vunpack.c.l.b16 %v895
    %v1080 = vunpack.c.h.b16 %v895
    %v1081 = vunpack.c.l.b16 %v896
    %v1082 = vunpack.c.h.b16 %v896
    %v1083 = vunpack.c.l.b16 %v897
    %v1084 = vunpack.c.l.b16 %v898
    %v1085 = vunpack.c.h.b16 %v898
    %v1086 = vunpack.c.l.b16 %v899
    %v1087 = vunpack.c.h.b16 %v899
    %v1088 = vunpack.c.l.b16 %v900
    %v1089 = vunpack.c.h.b16 %v900
    %v1090 = vunpack.c.l.b16 %v901
    %v1091 = vunpack.c.l.b16 %v902
    %v1092 = vunpack.c.h.b16 %v902
    %v1093 = vunpack.c.l.b16 %v903
    %v1094 = vunpack.c.h.b16 %v903
    %v1095 = vunpack.c.l.b16 %v904
    %v1096 = vunpack.c.h.b16 %v904
    %v1097 = vunpack.c.l.b16 %v905
    %v1098 = vunpack.c.l.b16 %v906
    %v1099 = vunpack.c.h.b16 %v906
    %v1100 = vunpack.c.l.b16 %v907
    %v1101 = vunpack.c.h.b16 %v907
    %v1102 = vunpack.c.l.b16 %v908
    %v1103 = vunpack.c.h.b16 %v908
    %v1104 = vunpack.c.l.b16 %v909
    %v1105 = vunpack.c.l.b16 %v910
    %v1106 = vunpack.c.h.b16 %v910
    %v1107 = vunpack.c.l.b16 %v911
    %v1108 = vunpack.c.h.b16 %v911
    %v1109 = vunpack.c.l.b16 %v912
    %v1110 = vunpack.c.h.b16 %v912
    %v1111 = vunpack.c.l.b16 %v913
    %v1112 = vunpack.c.l.b16 %v914
    %v1113 = vunpack.c.h.b16 %v914
    %v1114 = vunpack.c.l.b16 %v915
    %v1115 = vunpack.c.h.b16 %v915
    %v1116 = vunpack.c.l.b16 %v916
    %v1117 = vunpack.c.h.b16 %v916
    %v1118 = vunpack.c.l.b16 %v917
    %v1119 = vunpack.c.l.b16 %v918
    %v1120 = vunpack.c.h.b16 %v918
    %v1121 = vunpack.c.l.b16 %v919
    %v1122 = vunpack.c.h.b16 %v919
    %v1123 = vunpack.c.l.b16 %v920
    %v1124 = vunpack.c.h.b16 %v920
    %v1125 = vunpack.c.l.b16 %v921
    %v1126 = vunpack.c.l.b16 %v922
    %v1127 = vunpack.c.h.b16 %v922
    %v1128 = vunpack.c.l.b16 %v923
    %v1129 = vunpack.c.h.b16 %v923
    %v1130 = vunpack.c.l.b16 %v924
    %v1131 = vunpack.c.h.b16 %v924
    %v1132 = vunpack.c.l.b16 %v925
    %v1133 = vunpack.c.l.b16 %v926
    %v1134 = vunpack.c.h.b16 %v926
    %v1135 = vunpack.c.l.b16 %v927
    %v1136 = vunpack.c.h.b16 %v927
    %v1137 = vunpack.c.l.b16 %v928
    %v1138 = vunpack.c.h.b16 %v928
    %v1139 = vunpack.c.l.b16 %v929
    %v1140 = vunpack.c.l.b16 %v930
    %v1141 = vunpack.c.h.b16 %v930
    %v1142 = vunpack.c.l.b16 %v931
    %v1143 = vunpack.c.h.b16 %v931
    %v1144 = vunpack.c.l.b16 %v932
    %v1145 = vunpack.c.h.b16 %v932
    %v1146 = vunpack.c.l.b16 %v933
    %v1147 = vpack.c.b16 %v1042, %v1035
    %v1148 = vpack.c.b16 %v1043, %v1036
    %v1149 = vpack.c.b16 %v1044, %v1037
    %v1150 = vpack.c.b16 %v1045, %v1038
    %v1151 = vpack.c.b16 %v1046, %v1039
    %v1152 = vpack.c.b16 %v1047, %v1040
    %v1153 = vpack.c.b16 %v1048, %v1041
    %v1154 = vpack.c.b16 %v1056, %v1049
    %v1155 = vpack.c.b16 %v1057, %v1050
    %v1156 = vpack.c.b16 %v1058, %v1051
    %v1157 = vpack.c.b16 %v1059, %v1052
    %v1158 = vpack.c.b16 %v1060, %v1053
    %v1159 = vpack.c.b16 %v1061, %v1054
    %v1160 = vpack.c.b16 %v1062, %v1055
    %v1161 = vpack.c.b16 %v1070, %v1063
    %v1162 = vpack.c.b16 %v1071, %v1064
    %v1163 = vpack.c.b16 %v1072, %v1065
    %v1164 = vpack.c.b16 %v1073, %v1066
    %v1165 = vpack.c.b16 %v1074, %v1067
    %v1166 = vpack.c.b16 %v1075, %v1068
    %v1167 = vpack.c.b16 %v1076, %v1069
    %v1168 = vpack.c.b16 %v1084, %v1077
    %v1169 = vpack.c.b16 %v1085, %v1078
    %v1170 = vpack.c.b16 %v1086, %v1079
    %v1171 = vpack.c.b16 %v1087, %v1080
    %v1172 = vpack.c.b16 %v1088, %v1081
    %v1173 = vpack.c.b16 %v1089, %v1082
    %v1174 = vpack.c.b16 %v1090, %v1083
    %v1175 = vpack.c.b16 %v1098, %v1091
    %v1176 = vpack.c.b16 %v1099, %v1092
    %v1177 = vpack.c.b16 %v1100, %v1093
    %v1178 = vpack.c.b16 %v1101, %v1094
    %v1179 = vpack.c.b16 %v1102, %v1095
    %v1180 = vpack.c.b16 %v1103, %v1096
    %v1181 = vpack.c.b16 %v1104, %v1097
    %v1182 = vpack.c.b16 %v1112, %v1105
    %v1183 = vpack.c.b16 %v1113, %v1106
    %v1184 = vpack.c.b16 %v1114, %v1107
    %v1185 = vpack.c.b16 %v1115, %v1108
    %v1186 = vpack.c.b16 %v1116, %v1109
    %v1187 = vpack.c.b16 %v1117, %v1110
    %v1188 = vpack.c.b16 %v1118, %v1111
    %v1189 = vpack.c.b16 %v1126, %v1119
    %v1190 = vpack.c.b16 %v1127, %v1120
    %v1191 = vpack.c.b16 %v1128, %v1121
    %v1192 = vpack.c.b16 %v1129, %v1122
    %v1193 = vpack.c.b16 %v1130, %v1123
    %v1194 = vpack.c.b16 %v1131, %v1124
    %v1195 = vpack.c.b16 %v1132, %v1125
    %v1196 = vpack.c.b16 %v1140, %v1133
    %v1197 = vpack.c.b16 %v1141, %v1134
    %v1198 = vpack.c.b16 %v1142, %v1135
    %v1199 = vpack.c.b16 %v1143, %v1136
    %v1200 = vpack.c.b16 %v1144, %v1137
    %v1201 = vpack.c.b16 %v1145, %v1138
    %v1202 = vpack.c.b16 %v1146, %v1139
    %1259 = vmatprep.subr.bf16.mxu0 %v1197
    %1260 = vmatpush1.bf16.msra.mxu0 %v1196
    %1261 = vmatprep.subr.bf16.mxu0 %v1190
    %1262 = vmatpush1.bf16.msra.mxu0 %v1189
    %1263 = vmatprep.subr.bf16.mxu0 %v1183
    %1264 = vmatpush1.bf16.msra.mxu0 %v1182
    %1265 = vmatprep.subr.bf16.mxu0 %v1176
    %1266 = vmatpush1.bf16.msra.mxu0 %v1175
    %1267 = vmatprep.subr.bf16.mxu0 %v1169
    %1268 = vmatpush1.bf16.msra.mxu0 %v1168
    %1269 = vmatprep.subr.bf16.mxu0 %v1162
    %1270 = vmatpush1.bf16.msra.mxu0 %v1161
    %1271 = vmatprep.subr.bf16.mxu0 %v1155
    %1272 = vmatpush1.bf16.msra.mxu0 %v1154
    %1273 = vmatprep.subr.bf16.mxu0 %v1148
    %1274 = vmatpush1.bf16.msra.mxu0 %v1147
    %1275 = vmatprep.subr.bf16.mxu0 0
    %1276 = vmatpush2.bf16.msra.mxu0 0
    %1277 = vmatprep.subr.bf16.mxu0 0
    %1278 = vmatpush2.bf16.msra.mxu0 0
    %1279 = vmatprep.subr.bf16.mxu0 0
    %1280 = vmatpush2.bf16.msra.mxu0 0
    %1281 = vmatprep.subr.bf16.mxu0 0
    %1282 = vmatpush2.bf16.msra.mxu0 0
    %1283 = vmatprep.subr.bf16.mxu0 0
    %1284 = vmatpush2.bf16.msra.mxu0 0
    %1285 = vmatprep.subr.bf16.mxu0 0
    %1286 = vmatpush2.bf16.msra.mxu0 0
    %1287 = vmatprep.subr.bf16.mxu0 0
    %1288 = vmatpush2.bf16.msra.mxu0 0
    %1289 = vmatprep.subr.bf16.mxu0 0
    %1290 = vmatpush2.bf16.msra.mxu0 0
    %1291 = vmatprep.mubr.bf16.mxu0 0
    %1292 = vmatmul.mubr.bf16.gmra.mxu0 %v869
    %v1293 = vpop.f32.mrf.mxu0
    %v1294 = vadd.f32 %v939, %v1293
    %v1295 = vpop.f32.mrf.mxu0
    %v1296 = vadd.f32 %v943, %v1295
    %v1297 = vpop.f32.mrf.mxu0
    %v1298 = vadd.f32 %v939, %v1297
    %v1299 = vpop.f32.mrf.mxu0
    %v1300 = vadd.f32 %v943, %v1299
    %1301 = vdwg.mxu0
    %1302 = vmatprep.subr.bf16.mxu0 %v1199
    %1303 = vmatpush1.bf16.msra.mxu0 %v1198
    %1304 = vmatprep.subr.bf16.mxu0 %v1192
    %1305 = vmatpush1.bf16.msra.mxu0 %v1191
    %1306 = vmatprep.subr.bf16.mxu0 %v1185
    %1307 = vmatpush1.bf16.msra.mxu0 %v1184
    %1308 = vmatprep.subr.bf16.mxu0 %v1178
    %1309 = vmatpush1.bf16.msra.mxu0 %v1177
    %1310 = vmatprep.subr.bf16.mxu0 %v1171
    %1311 = vmatpush1.bf16.msra.mxu0 %v1170
    %1312 = vmatprep.subr.bf16.mxu0 %v1164
    %1313 = vmatpush1.bf16.msra.mxu0 %v1163
    %1314 = vmatprep.subr.bf16.mxu0 %v1157
    %1315 = vmatpush1.bf16.msra.mxu0 %v1156
    %1316 = vmatprep.subr.bf16.mxu0 %v1150
    %1317 = vmatpush1.bf16.msra.mxu0 %v1149
    %1318 = vmatprep.subr.bf16.mxu0 0
    %1319 = vmatpush2.bf16.msra.mxu0 0
    %1320 = vmatprep.subr.bf16.mxu0 0
    %1321 = vmatpush2.bf16.msra.mxu0 0
    %1322 = vmatprep.subr.bf16.mxu0 0
    %1323 = vmatpush2.bf16.msra.mxu0 0
    %1324 = vmatprep.subr.bf16.mxu0 0
    %1325 = vmatpush2.bf16.msra.mxu0 0
    %1326 = vmatprep.subr.bf16.mxu0 0
    %1327 = vmatpush2.bf16.msra.mxu0 0
    %1328 = vmatprep.subr.bf16.mxu0 0
    %1329 = vmatpush2.bf16.msra.mxu0 0
    %1330 = vmatprep.subr.bf16.mxu0 0
    %1331 = vmatpush2.bf16.msra.mxu0 0
    %1332 = vmatprep.subr.bf16.mxu0 0
    %1333 = vmatpush2.bf16.msra.mxu0 0
    %1334 = vmatprep.mubr.bf16.mxu0 0
    %1335 = vmatmul.mubr.bf16.gmra.mxu0 %v869
    %v1336 = vpop.f32.mrf.mxu0
    %v1337 = vadd.f32 %v947, %v1336
    %v1338 = vpop.f32.mrf.mxu0
    %v1339 = vadd.f32 %v951, %v1338
    %v1340 = vpop.f32.mrf.mxu0
    %v1341 = vadd.f32 %v947, %v1340
    %v1342 = vpop.f32.mrf.mxu0
    %v1343 = vadd.f32 %v951, %v1342
    %1344 = vdwg.mxu0
    %1345 = vmatprep.subr.bf16.mxu0 %v1201
    %1346 = vmatpush1.bf16.msra.mxu0 %v1200
    %1347 = vmatprep.subr.bf16.mxu0 %v1194
    %1348 = vmatpush1.bf16.msra.mxu0 %v1193
    %1349 = vmatprep.subr.bf16.mxu0 %v1187
    %1350 = vmatpush1.bf16.msra.mxu0 %v1186
    %1351 = vmatprep.subr.bf16.mxu0 %v1180
    %1352 = vmatpush1.bf16.msra.mxu0 %v1179
    %1353 = vmatprep.subr.bf16.mxu0 %v1173
    %1354 = vmatpush1.bf16.msra.mxu0 %v1172
    %1355 = vmatprep.subr.bf16.mxu0 %v1166
    %1356 = vmatpush1.bf16.msra.mxu0 %v1165
    %1357 = vmatprep.subr.bf16.mxu0 %v1159
    %1358 = vmatpush1.bf16.msra.mxu0 %v1158
    %1359 = vmatprep.subr.bf16.mxu0 %v1152
    %1360 = vmatpush1.bf16.msra.mxu0 %v1151
    %1361 = vmatprep.subr.bf16.mxu0 0
    %1362 = vmatpush2.bf16.msra.mxu0 0
    %1363 = vmatprep.subr.bf16.mxu0 0
    %1364 = vmatpush2.bf16.msra.mxu0 0
    %1365 = vmatprep.subr.bf16.mxu0 0
    %1366 = vmatpush2.bf16.msra.mxu0 0
    %1367 = vmatprep.subr.bf16.mxu0 0
    %1368 = vmatpush2.bf16.msra.mxu0 0
    %1369 = vmatprep.subr.bf16.mxu0 0
    %1370 = vmatpush2.bf16.msra.mxu0 0
    %1371 = vmatprep.subr.bf16.mxu0 0
    %1372 = vmatpush2.bf16.msra.mxu0 0
    %1373 = vmatprep.subr.bf16.mxu0 0
    %1374 = vmatpush2.bf16.msra.mxu0 0
    %1375 = vmatprep.subr.bf16.mxu0 0
    %1376 = vmatpush2.bf16.msra.mxu0 0
    %1377 = vmatprep.mubr.bf16.mxu0 0
    %1378 = vmatmul.mubr.bf16.gmra.mxu0 %v869
    %v1379 = vpop.f32.mrf.mxu0
    %v1380 = vadd.f32 %v955, %v1379
    %v1381 = vpop.f32.mrf.mxu0
    %v1382 = vadd.f32 %v959, %v1381
    %v1383 = vpop.f32.mrf.mxu0
    %v1384 = vadd.f32 %v955, %v1383
    %v1385 = vpop.f32.mrf.mxu0
    %v1386 = vadd.f32 %v959, %v1385
    %1387 = vdwg.mxu0
    %1388 = vmatprep.subr.bf16.mxu0 0
    %1389 = vmatpush1.bf16.msra.mxu0 %v1202
    %1390 = vmatprep.subr.bf16.mxu0 0
    %1391 = vmatpush1.bf16.msra.mxu0 %v1195
    %1392 = vmatprep.subr.bf16.mxu0 0
    %1393 = vmatpush1.bf16.msra.mxu0 %v1188
    %1394 = vmatprep.subr.bf16.mxu0 0
    %1395 = vmatpush1.bf16.msra.mxu0 %v1181
    %1396 = vmatprep.subr.bf16.mxu0 0
    %1397 = vmatpush1.bf16.msra.mxu0 %v1174
    %1398 = vmatprep.subr.bf16.mxu0 0
    %1399 = vmatpush1.bf16.msra.mxu0 %v1167
    %1400 = vmatprep.subr.bf16.mxu0 0
    %1401 = vmatpush1.bf16.msra.mxu0 %v1160
    %1402 = vmatprep.subr.bf16.mxu0 0
    %1403 = vmatpush1.bf16.msra.mxu0 %v1153
    %1404 = vmatprep.subr.bf16.mxu0 0
    %1405 = vmatpush2.bf16.msra.mxu0 0
    %1406 = vmatprep.subr.bf16.mxu0 0
    %1407 = vmatpush2.bf16.msra.mxu0 0
    %1408 = vmatprep.subr.bf16.mxu0 0
    %1409 = vmatpush2.bf16.msra.mxu0 0
    %1410 = vmatprep.subr.bf16.mxu0 0
    %1411 = vmatpush2.bf16.msra.mxu0 0
    %1412 = vmatprep.subr.bf16.mxu0 0
    %1413 = vmatpush2.bf16.msra.mxu0 0
    %1414 = vmatprep.subr.bf16.mxu0 0
    %1415 = vmatpush2.bf16.msra.mxu0 0
    %1416 = vmatprep.subr.bf16.mxu0 0
    %1417 = vmatpush2.bf16.msra.mxu0 0
    %1418 = vmatprep.subr.bf16.mxu0 0
    %1419 = vmatpush2.bf16.msra.mxu0 0
    %1420 = vmatprep.mubr.bf16.mxu0 0
    %1421 = vmatmul.mubr.bf16.gmra.mxu0 %v869
    %v1422 = vpop.f32.mrf.mxu0
    %v1423 = vadd.f32 %v963, %v1422
    %v1424 = vpop.f32.mrf.mxu0
    %v1425 = vpop.f32.mrf.mxu0
    %v1426 = vadd.f32 %v963, %v1425
    %v1427 = vpop.f32.mrf.mxu0
    %1428 = vdwg.mxu0
    %v1429 = vtanh.pop %v1294
    %v1430 = vtanh.pop %v1296
    %v1431 = vtanh.pop %v1337
    %v1432 = vtanh.pop %v1339
    %v1433 = vtanh.pop %v1380
    %v1434 = vtanh.pop %v1382
    %v1435 = vtanh.pop %v1423
    %v1436 = vtanh.pop %v1298
    %v1437 = vtanh.pop %v1300
    %v1438 = vtanh.pop %v1341
    %v1439 = vtanh.pop %v1343
    %v1440 = vtanh.pop %v1384
    %v1441 = vtanh.pop %v1386
    %v1442 = vtanh.pop %v1426
    %v1443 = vmul.f32 %v1429, 0.5
    %v1444 = vmul.f32 %v1430, 0.5
    %v1445 = vmul.f32 %v1431, 0.5
    %v1446 = vmul.f32 %v1432, 0.5
    %v1447 = vmul.f32 %v1433, 0.5
    %v1448 = vmul.f32 %v1434, 0.5
    %v1449 = vmul.f32 %v1435, 0.5
    %v1450 = vmul.f32 %v1436, 0.5
    %v1451 = vmul.f32 %v1437, 0.5
    %v1452 = vmul.f32 %v1438, 0.5
    %v1453 = vmul.f32 %v1439, 0.5
    %v1454 = vmul.f32 %v1440, 0.5
    %v1455 = vmul.f32 %v1441, 0.5
    %v1456 = vmul.f32 %v1442, 0.5
    %v1457 = vadd.f32 %v1443, 0.5
    %v1458 = vadd.f32 %v1444, 0.5
    %v1459 = vadd.f32 %v1445, 0.5
    %v1460 = vadd.f32 %v1446, 0.5
    %v1461 = vadd.f32 %v1447, 0.5
    %v1462 = vadd.f32 %v1448, 0.5
    %v1463 = vadd.f32 %v1449, 0.5
    %v1464 = vadd.f32 %v1450, 0.5
    %v1465 = vadd.f32 %v1451, 0.5
    %v1466 = vadd.f32 %v1452, 0.5
    %v1467 = vadd.f32 %v1453, 0.5
    %v1468 = vadd.f32 %v1454, 0.5
    %v1469 = vadd.f32 %v1455, 0.5
    %v1470 = vadd.f32 %v1456, 0.5
    %vm1471 = vcmask 523264
    %1472 = vst.msk [vmem:[#allocation4] sm:$0xff] %vm1471, %v748
    %1473 = vst.msk [vmem:[#allocation4 + $0x8] sm:$0xff] %vm1471, %v749
    %v1474 = vpack.c.bf16 %v1464, %v1457
    %v1475 = vpack.c.bf16 %v1465, %v1458
    %v1476 = vpack.c.bf16 %v1466, %v1459
    %v1477 = vpack.c.bf16 %v1467, %v1460
    %v1478 = vpack.c.bf16 %v1468, %v1461
    %v1479 = vpack.c.bf16 %v1469, %v1462
    %v1480 = vpack.c.bf16 %v1470, %v1463
    %v1488 = vunpack.c.l.b16 %v1474
    %v1489 = vunpack.c.l.b16 %v1475
    %v1490 = vunpack.c.l.b16 %v1476
    %v1491 = vunpack.c.l.b16 %v1477
    %v1492 = vunpack.c.l.b16 %v1478
    %v1493 = vunpack.c.l.b16 %v1479
    %v1494 = vunpack.c.l.b16 %v1480
    %v1495 = vunpack.c.h.b16 %v1474
    %v1496 = vunpack.c.h.b16 %v1475
    %v1497 = vunpack.c.h.b16 %v1476
    %v1498 = vunpack.c.h.b16 %v1477
    %v1499 = vunpack.c.h.b16 %v1478
    %v1500 = vunpack.c.h.b16 %v1479
    %v1501 = vunpack.c.h.b16 %v1480
    %v1502 = vpack.c.b16 %v1489, %v1488
    %v1503 = vpack.c.b16 %v1491, %v1490
    %v1504 = vpack.c.b16 %v1493, %v1492
    %v1505 = vpack.c.b16 %v1494, %v1494
    %v1506 = vpack.c.b16 %v1496, %v1495
    %v1507 = vpack.c.b16 %v1498, %v1497
    %v1508 = vpack.c.b16 %v1500, %v1499
    %v1509 = vpack.c.b16 %v1501, %v1501
    %1518 = vst [vmem:[#allocation2] sm:$0xff] %v1502
    %1519 = vst [vmem:[#allocation2 + $0x8] sm:$0xff] %v1503
    %1520 = vst [vmem:[#allocation2 + $0x10] sm:$0xff] %v1504
    %vm1521 = vcmask 125952
    %1522 = vst.msk [vmem:[#allocation2 + $0x18] sm:$0xf] %vm1521, %v1505
    %1523 = vst [vmem:[#allocation2 + $0x1c] sm:$0xff] %v1506
    %1524 = vst [vmem:[#allocation2 + $0x24] sm:$0xff] %v1507
    %1525 = vst [vmem:[#allocation2 + $0x2c] sm:$0xff] %v1508
    %1526 = vst.msk [vmem:[#allocation2 + $0x34] sm:$0xf] %vm1521, %v1509
    // Predicated region
    $region38: #{autoencoder_forward.1} parent=1 // pred_check
      _
    $region39: #{autoencoder_forward.1} parent=1 // pred_check_branch
      %1528 = sbr.rel (0) target = $region41
    $region40: #{autoencoder_forward.1} parent=1 // pred_region
      %s1530 = ssub.s32 896, 896
      %1531 = vsyncadd [#allocation3], %s1530
      %s1532 = sshll.u32 [#allocation2], 4
      %s1533 = int_to_ptr.vmem [resolvable:$true] %s1532
      %1538 = dma.vmem_to_hbm [thread:$0]  %s1533, 896, %s9, [#allocation3], 448, 448, 28
    $region41: #{autoencoder_forward.1} parent=1 // pred_fallthru
      _
    // Predicated region
    $region42: #{autoencoder_forward.1} parent=1 // pred_check
      _
    $region43: #{autoencoder_forward.1} parent=1 // pred_check_branch
      %1540 = sbr.rel (0) target = $region45
    $region44: #{autoencoder_forward.1} parent=1 // pred_region
      %s1542 = ssub.s32 256, 256
      %1543 = vsyncadd [#allocation5], %s1542
      %s1544 = sshll.u32 [#allocation4], 4
      %s1545 = int_to_ptr.vmem [resolvable:$true] %s1544
      %1550 = dma.vmem_to_hbm [thread:$0]  %s1545, 256, %s10, [#allocation5], 128, 128, 8
    $region45: #{autoencoder_forward.1} parent=1 // pred_fallthru
      _
    // Predicated region
    $region46: #{autoencoder_forward.1} parent=1 // pred_check
      _
    $region47: #{autoencoder_forward.1} parent=1 // pred_check_branch
      %1552 = sbr.rel (0) target = $region49
    $region48: #{autoencoder_forward.1} parent=1 // pred_region
      %1553 = dma.done [#allocation3], 896
    $region49: #{autoencoder_forward.1} parent=1 // pred_fallthru
      _
    // Predicated region
    $region50: #{autoencoder_forward.1} parent=1 // pred_check
      _
    $region51: #{autoencoder_forward.1} parent=1 // pred_check_branch
      %1555 = sbr.rel (0) target = $region53
    $region52: #{autoencoder_forward.1} parent=1 // pred_region
      %1556 = dma.done [#allocation5], 256
    $region53: #{autoencoder_forward.1} parent=1 // pred_fallthru
      _
    %1557 = vsyncpa [#allocation3], 1
    %1558 = vsyncpa [#allocation5], 1

</llo_original>
